<compile_context>
chip_gen: v6e
topology: v6e:2x2x1
jax: 0.10.0
libtpu: 0.0.40
codegen_flags: <defaults>
</compile_context>

<pallas_src>
import functools
import math

import jax
import jax.numpy as jnp
from jax.experimental import pallas as pl
from jax.experimental.pallas import tpu as pltpu

EPS = 1e-5


def _layer_norm(x, gamma, beta):
    # Centered (two-pass) variance: numerically safe for large-mean activations.
    mean = jnp.mean(x, axis=-1, keepdims=True)
    c = x - mean
    var = jnp.mean(c * c, axis=-1, keepdims=True)
    return c * jax.lax.rsqrt(var + EPS) * gamma + beta


# ---------------------------------------------------------------------------
# Pass 1: LN1 + fused QKV projection (each token projected exactly once).
# ---------------------------------------------------------------------------
def _qkv_kernel(x_ref, ln1g_ref, ln1b_ref, wqkv_ref, bqkv_ref,
                q_ref, k_ref, v_ref, *, num_heads):
    x = x_ref[0]                                       # (ta, D) f32
    ta, D = x.shape
    hd = D // num_heads

    h = _layer_norm(x, ln1g_ref[0], ln1b_ref[0])
    # one fused (ta, D) @ (D, 3D) MXU matmul, f32 accumulation
    qkv = jnp.dot(h.astype(wqkv_ref.dtype), wqkv_ref[...],
                  preferred_element_type=jnp.float32) + bqkv_ref[0]

    def split_heads(t):                                # (ta, D) -> (H, ta, hd)
        return t.reshape(ta, num_heads, hd).transpose(1, 0, 2)

    q_ref[0] = split_heads(qkv[:, :D]).astype(q_ref.dtype)       # scale already in Wq
    k_ref[0] = split_heads(qkv[:, D:2 * D]).astype(k_ref.dtype)
    v_ref[0] = split_heads(qkv[:, 2 * D:]).astype(v_ref.dtype)


# ---------------------------------------------------------------------------
# Pass 2: per-head flash attention with online softmax (kv axis = reduction).
# ---------------------------------------------------------------------------
def _flash_kernel(q_ref, k_ref, v_ref, o_ref, m_scr, l_scr, acc_scr):
    ki = pl.program_id(3)

    @pl.when(ki == 0)
    def _():
        m_scr[...] = jnp.full_like(m_scr, -jnp.inf)
        l_scr[...] = jnp.zeros_like(l_scr)
        acc_scr[...] = jnp.zeros_like(acc_scr)

    q = q_ref[0, 0]                                    # (tq, hd), mm_dtype
    k = k_ref[0, 0]                                    # (tk, hd)
    v = v_ref[0, 0]                                    # (tk, hd)

    # per-head (tq, tk) score tile (fits the vreg file; no (H,tq,tk) spill)
    s = jnp.einsum("qd,kd->qk", q, k, preferred_element_type=jnp.float32)

    m_prev = m_scr[...]                                # (tq, 1)
    m_new = jnp.maximum(m_prev, s.max(axis=-1, keepdims=True))
    alpha = jnp.exp(m_prev - m_new)
    p = jnp.exp(s - m_new)                             # (tq, tk) f32
    l_scr[...] = alpha * l_scr[...] + p.sum(axis=-1, keepdims=True)
    acc_scr[...] = alpha * acc_scr[...] + jnp.dot(
        p.astype(v.dtype), v, preferred_element_type=jnp.float32)
    m_scr[...] = m_new

    @pl.when(ki == pl.num_programs(3) - 1)
    def _():
        # exact divide: epilogue-only (once per q tile), negligible cost.
        o_ref[0, 0] = (acc_scr[...] / l_scr[...]).astype(o_ref.dtype)


# ---------------------------------------------------------------------------
# Pass 3: head merge + Wo + residual + LN2 + FF(ReLU) + residual.
# ---------------------------------------------------------------------------
def _proj_ff_kernel(ctx_ref, x_ref, wo_ref, bo_ref, ln2g_ref, ln2b_ref,
                    w1_ref, b1_ref, w2_ref, b2_ref, o_ref):
    ctx = ctx_ref[0]                                   # (H, tc, hd)
    H, tc, hd = ctx.shape
    D = H * hd
    ctx2d = ctx.transpose(1, 0, 2).reshape(tc, D)      # merge heads (once per row tile)

    attn = jnp.dot(ctx2d.astype(wo_ref.dtype), wo_ref[...],
                   preferred_element_type=jnp.float32) + bo_ref[0]
    x1 = x_ref[0] + attn                               # first residual

    h2 = _layer_norm(x1, ln2g_ref[0], ln2b_ref[0])
    ff = jnp.maximum(jnp.dot(h2.astype(w1_ref.dtype), w1_ref[...],
                             preferred_element_type=jnp.float32) + b1_ref[0], 0.0)
    ff = jnp.dot(ff.astype(w2_ref.dtype), w2_ref[...],
                 preferred_element_type=jnp.float32) + b2_ref[0]
    o_ref[0] = (x1 + ff).astype(o_ref.dtype)           # second residual


# ---------------------------------------------------------------------------
# Wrapper
# ---------------------------------------------------------------------------
def _const_spec(arr):
    nd = arr.ndim
    # whole-array block, same block index at every grid step (stays resident)
    return pl.BlockSpec(arr.shape, lambda *args, _nd=nd: (0,) * _nd)


def _derived_vmem_limit():
    # ~3/4 of physical VMEM: ~96 MiB on v5e/v6e (128 MiB), ~48 MiB on v7x (64 MiB),
    # leaving headroom for compiler scratch / spills.
    try:
        cap = int(pltpu.get_tpu_info().vmem_capacity_bytes)
    except Exception:
        cap = 128 * 1024 * 1024
    return (3 * cap) // 4


def transformer_block(x, params, num_heads, *, ta=None, tc=None, tq=None, tk=None,
                      mm_dtype=jnp.bfloat16, vmem_limit_bytes=None):
    """x: (B, S, D). Linear weights stored as (in, out): y = x @ W + b."""
    B, S, D = x.shape
    assert D % num_heads == 0
    hd = D // num_heads

    # 256-wide tiles for bf16 (v6e/v7x MXU is 256x256); 128 for f32 / v5e.
    big = 256 if mm_dtype == jnp.bfloat16 else 128
    ta = min(S, big) if ta is None else ta
    tc = min(S, big) if tc is None else tc
    tq = min(S, big) if tq is None else tq
    tk = min(S, big) if tk is None else tk
    assert S % ta == 0 and S % tc == 0 and S % tq == 0 and S % tk == 0

    if vmem_limit_bytes is None:
        vmem_limit_bytes = _derived_vmem_limit()

    f32 = jnp.float32
    scale = 1.0 / math.sqrt(hd)
    # Fold the softmax scale into Wq/bq (host side, free) and pre-cast all
    # weight matrices to mm_dtype (halves weight DMA + removes per-step casts).
    wqkv = jnp.concatenate([params["wq"] * scale, params["wk"], params["wv"]],
                           axis=1).astype(mm_dtype)
    bqkv = jnp.concatenate([params["bq"] * scale, params["bk"], params["bv"]],
                           axis=1).astype(f32)
    wo = params["wo"].astype(mm_dtype)
    w1 = params["w1"].astype(mm_dtype)
    w2 = params["w2"].astype(mm_dtype)

    isz = jnp.dtype(mm_dtype).itemsize
    xsz = jnp.dtype(x.dtype).itemsize
    cp = lambda sem: pltpu.CompilerParams(dimension_semantics=sem,
                                          vmem_limit_bytes=vmem_limit_bytes)

    # -------- pass 1: LN1 + fused QKV projection ---------------------------
    hs_shape = jax.ShapeDtypeStruct((B, num_heads, S, hd), mm_dtype)
    q, k, v = pl.pallas_call(
        functools.partial(_qkv_kernel, num_heads=num_heads),
        out_shape=(hs_shape, hs_shape, hs_shape),
        grid_spec=pltpu.PrefetchScalarGridSpec(
            num_scalar_prefetch=0,
            grid=(B, S // ta),
            in_specs=[pl.BlockSpec((1, ta, D), lambda b, i: (b, i, 0)),
                      _const_spec(params["ln1_g"]), _const_spec(params["ln1_b"]),
                      _const_spec(wqkv), _const_spec(bqkv)],
            out_specs=[pl.BlockSpec((1, num_heads, ta, hd),
                                    lambda b, i: (b, 0, i, 0))] * 3),
        compiler_params=cp(("parallel", "parallel")),
        cost_estimate=pl.CostEstimate(
            flops=int(6 * B * S * D * D),
            transcendentals=int(B * S),
            bytes_accessed=int(xsz * B * S * D + isz * 3 * D * D
                               + 4 * 5 * D + isz * 3 * B * S * D)),
    )(x, params["ln1_g"], params["ln1_b"], wqkv, bqkv)

    # -------- pass 2: per-head flash attention -----------------------------
    ctx = pl.pallas_call(
        _flash_kernel,
        out_shape=jax.ShapeDtypeStruct((B, num_heads, S, hd), mm_dtype),
        grid_spec=pltpu.PrefetchScalarGridSpec(
            num_scalar_prefetch=0,
            grid=(B, num_heads, S // tq, S // tk),       # kv axis last (reduction)
            in_specs=[
                pl.BlockSpec((1, 1, tq, hd), lambda b, h, qi, ki: (b, h, qi, 0)),
                pl.BlockSpec((1, 1, tk, hd), lambda b, h, qi, ki: (b, h, ki, 0)),
                pl.BlockSpec((1, 1, tk, hd), lambda b, h, qi, ki: (b, h, ki, 0)),
            ],
            out_specs=pl.BlockSpec((1, 1, tq, hd), lambda b, h, qi, ki: (b, h, qi, 0)),
            scratch_shapes=[
                pltpu.VMEM((tq, 1), jnp.float32),     # running max  m
                pltpu.VMEM((tq, 1), jnp.float32),     # running sum  l
                pltpu.VMEM((tq, hd), jnp.float32),    # per-head output accumulator
            ]),
        compiler_params=cp(("parallel", "parallel", "parallel", "arbitrary")),
        cost_estimate=pl.CostEstimate(
            flops=int(4 * B * S * S * D),
            transcendentals=int(B * num_heads * S * S),
            # q in + ctx out read/written once; k and v re-streamed once per q tile
            bytes_accessed=int(isz * (2 * B * S * D + 2 * B * (S // tq) * S * D))),
    )(q, k, v)

    # -------- pass 3: Wo + residual + LN2 + FF + residual -------------------
    out = pl.pallas_call(
        _proj_ff_kernel,
        out_shape=jax.ShapeDtypeStruct((B, S, D), x.dtype),
        grid_spec=pltpu.PrefetchScalarGridSpec(
            num_scalar_prefetch=0,
            grid=(B, S // tc),
            in_specs=[
                pl.BlockSpec((1, num_heads, tc, hd), lambda b, i: (b, 0, i, 0)),
                pl.BlockSpec((1, tc, D), lambda b, i: (b, i, 0)),
                _const_spec(wo), _const_spec(params["bo"]),
                _const_spec(params["ln2_g"]), _const_spec(params["ln2_b"]),
                _const_spec(w1), _const_spec(params["b1"]),
                _const_spec(w2), _const_spec(params["b2"]),
            ],
            out_specs=pl.BlockSpec((1, tc, D), lambda b, i: (b, i, 0))),
        compiler_params=cp(("parallel", "parallel")),
        cost_estimate=pl.CostEstimate(
            flops=int(18 * B * S * D * D),
            transcendentals=int(B * S),
            bytes_accessed=int(isz * (B * S * D + 9 * D * D)
                               + xsz * 2 * B * S * D + 4 * 11 * D)),
    )(ctx, x, wo, params["bo"], params["ln2_g"], params["ln2_b"],
      w1, params["b1"], w2, params["b2"])

    return out


# ---------------------------------------------------------------------------
# Parameters + pure-JAX reference
# ---------------------------------------------------------------------------
def make_params(key, dim, num_heads):
    expand = 4 * dim
    ks = jax.random.split(key, 8)
    scale = 0.02

    def lin(k, fan_in, fan_out):
        return scale * jax.random.normal(k, (fan_in, fan_out), jnp.float32)

    return {
        "ln1_g": jnp.ones((1, dim), jnp.float32),
        "ln1_b": jnp.zeros((1, dim), jnp.float32),
        "wq": lin(ks[0], dim, dim), "bq": jnp.zeros((1, dim), jnp.float32),
        "wk": lin(ks[1], dim, dim), "bk": jnp.zeros((1, dim), jnp.float32),
        "wv": lin(ks[2], dim, dim), "bv": jnp.zeros((1, dim), jnp.float32),
        "wo": lin(ks[3], dim, dim), "bo": jnp.zeros((1, dim), jnp.float32),
        "ln2_g": jnp.ones((1, dim), jnp.float32),
        "ln2_b": jnp.zeros((1, dim), jnp.float32),
        "w1": lin(ks[4], dim, expand),
        "b1": scale * jax.random.normal(ks[5], (1, expand), jnp.float32),
        "w2": lin(ks[6], expand, dim),
        "b2": scale * jax.random.normal(ks[7], (1, dim), jnp.float32),
    }


def reference_block(x, p, num_heads):
    B, S, D = x.shape
    hd = D // num_heads

    def ln(x, g, b):
        m = jnp.mean(x, -1, keepdims=True)
        v = jnp.mean((x - m) ** 2, -1, keepdims=True)
        return (x - m) / jnp.sqrt(v + EPS) * g + b

    h = ln(x, p["ln1_g"][0], p["ln1_b"][0])
    q = h @ p["wq"] + p["bq"][0]
    k = h @ p["wk"] + p["bk"][0]
    v = h @ p["wv"] + p["bv"][0]
    q = q.reshape(B, S, num_heads, hd).transpose(0, 2, 1, 3)
    k = k.reshape(B, S, num_heads, hd).transpose(0, 2, 1, 3)
    v = v.reshape(B, S, num_heads, hd).transpose(0, 2, 1, 3)
    s = jnp.einsum("bhsd,bhtd->bhst", q, k) / jnp.sqrt(hd)
    pmat = jax.nn.softmax(s, axis=-1)
    attn = jnp.einsum("bhst,bhtd->bhsd", pmat, v).transpose(0, 2, 1, 3).reshape(B, S, D)
    attn = attn @ p["wo"] + p["bo"][0]
    x1 = x + attn
    h2 = ln(x1, p["ln2_g"][0], p["ln2_b"][0])
    ff = jnp.maximum(h2 @ p["w1"] + p["b1"][0], 0.0) @ p["w2"] + p["b2"][0]
    return x1 + ff


if __name__ == "__main__":
    # batch=2, seq=16, hidden=32, heads=4; tq=tk=8 forces a 2x2 q/kv tiling so
    # the per-head online-softmax carry across kv tiles is actually exercised.
    B, S, D, H = 2, 16, 32, 4

    key = jax.random.PRNGKey(0)
    k_x, k_p = jax.random.split(key)
    x = jax.random.normal(k_x, (B, S, D), jnp.float32)
    params = make_params(k_p, D, H)

    ref = reference_block(x, params, H)

    # f32 matmul-operand path (tight check)
    out = jax.block_until_ready(
        transformer_block(x, params, H, tq=8, tk=8, mm_dtype=jnp.float32))
    assert out.shape == (B, S, D)
    assert jnp.allclose(out, ref, atol=2e-3, rtol=2e-3), "f32 mismatch vs reference"

    # bf16 matmul-operand path (default; the v5e/v6e/v7x MXU configuration)
    out_bf16 = jax.block_until_ready(transformer_block(x, params, H, tq=8, tk=8))
    assert jnp.allclose(out_bf16, ref, atol=2e-2, rtol=2e-2), "bf16 mismatch vs reference"

    print("KERNEL_OK")
</pallas_src>

<mosaic_0001>
module attributes {stable_mosaic.version = 11 : i64} {
  func.func @_qkv_kernel(%arg0: i32, %arg1: i32, %arg2: memref<1x16x32xf32, #tpu.memory_space<vmem>>, %arg3: memref<1x32xf32, #tpu.memory_space<vmem>>, %arg4: memref<1x32xf32, #tpu.memory_space<vmem>>, %arg5: memref<32x96xf32, #tpu.memory_space<vmem>>, %arg6: memref<1x96xf32, #tpu.memory_space<vmem>>, %arg7: memref<1x4x16x8xf32, #tpu.memory_space<vmem>>, %arg8: memref<1x4x16x8xf32, #tpu.memory_space<vmem>>, %arg9: memref<1x4x16x8xf32, #tpu.memory_space<vmem>>) attributes {dimension_semantics = [#tpu.dimension_semantics<parallel>, #tpu.dimension_semantics<parallel>], iteration_bounds = array<i64: 2, 1>, scalar_prefetch = 0 : i64, scratch_operands = 0 : i64, tpu.core_type = #tpu.core_type<tc>, window_params = [{transform_indices = @transform_0, window_bounds = array<i64: 1, 16, 32>}, {pipeline_mode = #tpu.pipeline_mode<synchronous>, transform_indices = @transform_1, window_bounds = array<i64: 1, 32>}, {pipeline_mode = #tpu.pipeline_mode<synchronous>, transform_indices = @transform_2, window_bounds = array<i64: 1, 32>}, {pipeline_mode = #tpu.pipeline_mode<synchronous>, transform_indices = @transform_3, window_bounds = array<i64: 32, 96>}, {pipeline_mode = #tpu.pipeline_mode<synchronous>, transform_indices = @transform_4, window_bounds = array<i64: 1, 96>}, {transform_indices = @transform_5, window_bounds = array<i64: 1, 4, 16, 8>}, {transform_indices = @transform_6, window_bounds = array<i64: 1, 4, 16, 8>}, {transform_indices = @transform_7, window_bounds = array<i64: 1, 4, 16, 8>}]} {
    %c0 = arith.constant 0 : index
    %c0_0 = arith.constant 0 : index
    %c0_1 = arith.constant 0 : index
    %0 = vector.load %arg2[%c0, %c0_0, %c0_1] : memref<1x16x32xf32, #tpu.memory_space<vmem>>, vector<1x16x32xf32>
    %1 = vector.shape_cast %0 : vector<1x16x32xf32> to vector<16x32xf32>
    %c0_2 = arith.constant 0 : index
    %c0_3 = arith.constant 0 : index
    %2 = vector.load %arg3[%c0_2, %c0_3] : memref<1x32xf32, #tpu.memory_space<vmem>>, vector<1x32xf32>
    %3 = vector.shape_cast %2 : vector<1x32xf32> to vector<32xf32>
    %c0_4 = arith.constant 0 : index
    %c0_5 = arith.constant 0 : index
    %4 = vector.load %arg4[%c0_4, %c0_5] : memref<1x32xf32, #tpu.memory_space<vmem>>, vector<1x32xf32>
    %5 = vector.shape_cast %4 : vector<1x32xf32> to vector<32xf32>
    %cst = arith.constant dense<0.000000e+00> : vector<16xf32>
    %6 = vector.multi_reduction <add>, %1, %cst [1] : vector<16x32xf32> to vector<16xf32>
    %7 = vector.shape_cast %6 : vector<16xf32> to vector<16x1xf32>
    %cst_6 = arith.constant 3.200000e+01 : f32
    %8 = vector.broadcast %cst_6 : f32 to vector<16x1xf32>
    %9 = arith.divf %7, %8 : vector<16x1xf32>
    %10 = vector.broadcast %9 : vector<16x1xf32> to vector<16x32xf32>
    %11 = arith.subf %1, %10 : vector<16x32xf32>
    %12 = arith.mulf %11, %11 : vector<16x32xf32>
    %cst_7 = arith.constant dense<0.000000e+00> : vector<16xf32>
    %13 = vector.multi_reduction <add>, %12, %cst_7 [1] : vector<16x32xf32> to vector<16xf32>
    %14 = vector.shape_cast %13 : vector<16xf32> to vector<16x1xf32>
    %cst_8 = arith.constant 3.200000e+01 : f32
    %15 = vector.broadcast %cst_8 : f32 to vector<16x1xf32>
    %16 = arith.divf %14, %15 : vector<16x1xf32>
    %cst_9 = arith.constant 9.99999974E-6 : f32
    %17 = vector.broadcast %cst_9 : f32 to vector<16x1xf32>
    %18 = arith.addf %16, %17 : vector<16x1xf32>
    %19 = math.rsqrt %18 : vector<16x1xf32>
    %20 = vector.broadcast %19 : vector<16x1xf32> to vector<16x32xf32>
    %21 = arith.mulf %11, %20 : vector<16x32xf32>
    %22 = vector.shape_cast %3 : vector<32xf32> to vector<1x32xf32>
    %23 = vector.broadcast %22 : vector<1x32xf32> to vector<16x32xf32>
    %24 = arith.mulf %21, %23 : vector<16x32xf32>
    %25 = vector.shape_cast %5 : vector<32xf32> to vector<1x32xf32>
    %26 = vector.broadcast %25 : vector<1x32xf32> to vector<16x32xf32>
    %27 = arith.addf %24, %26 : vector<16x32xf32>
    %c0_10 = arith.constant 0 : index
    %c0_11 = arith.constant 0 : index
    %28 = vector.load %arg5[%c0_10, %c0_11] : memref<32x96xf32, #tpu.memory_space<vmem>>, vector<32x96xf32>
    %cst_12 = arith.constant dense<0.000000e+00> : vector<16x96xf32>
    %29 = tpu.matmul %27, %28, %cst_12 {dimension_numbers = #tpu.dot_dimension_numbers<[1], [0], [0], [1], [0, 0, 1, 1], [], []>} : vector<16x32xf32>, vector<32x96xf32>, vector<16x96xf32> -> vector<16x96xf32>
    %c0_13 = arith.constant 0 : index
    %c0_14 = arith.constant 0 : index
    %30 = vector.load %arg6[%c0_13, %c0_14] : memref<1x96xf32, #tpu.memory_space<vmem>>, vector<1x96xf32>
    %31 = vector.shape_cast %30 : vector<1x96xf32> to vector<96xf32>
    %32 = vector.shape_cast %31 : vector<96xf32> to vector<1x96xf32>
    %33 = vector.broadcast %32 : vector<1x96xf32> to vector<16x96xf32>
    %34 = arith.addf %29, %33 : vector<16x96xf32>
    %35 = vector.extract_strided_slice %34 {offsets = [0, 0], sizes = [16, 32], strides = [1, 1]} : vector<16x96xf32> to vector<16x32xf32>
    %36 = vector.shape_cast %35 : vector<16x32xf32> to vector<16x4x8xf32>
    %37 = tpu.transpose %36, [1, 0, 2] : vector<16x4x8xf32> -> vector<4x16x8xf32>
    %c0_15 = arith.constant 0 : index
    %c0_16 = arith.constant 0 : index
    %c0_17 = arith.constant 0 : index
    %c0_18 = arith.constant 0 : index
    %38 = vector.load %arg7[%c0_15, %c0_16, %c0_17, %c0_18] : memref<1x4x16x8xf32, #tpu.memory_space<vmem>>, vector<1x4x16x8xf32>
    %39 = vector.shape_cast %38 : vector<1x4x16x8xf32> to vector<4x16x8xf32>
    %40 = vector.shape_cast %37 : vector<4x16x8xf32> to vector<1x4x16x8xf32>
    tpu.vector_store %arg7[%c0_15, %c0_16, %c0_17, %c0_18], %40 {strides = array<i32>} : memref<1x4x16x8xf32, #tpu.memory_space<vmem>>, vector<1x4x16x8xf32>,
    %41 = vector.extract_strided_slice %34 {offsets = [0, 32], sizes = [16, 32], strides = [1, 1]} : vector<16x96xf32> to vector<16x32xf32>
    %42 = vector.shape_cast %41 : vector<16x32xf32> to vector<16x4x8xf32>
    %43 = tpu.transpose %42, [1, 0, 2] : vector<16x4x8xf32> -> vector<4x16x8xf32>
    %c0_19 = arith.constant 0 : index
    %c0_20 = arith.constant 0 : index
    %c0_21 = arith.constant 0 : index
    %c0_22 = arith.constant 0 : index
    %44 = vector.load %arg8[%c0_19, %c0_20, %c0_21, %c0_22] : memref<1x4x16x8xf32, #tpu.memory_space<vmem>>, vector<1x4x16x8xf32>
    %45 = vector.shape_cast %44 : vector<1x4x16x8xf32> to vector<4x16x8xf32>
    %46 = vector.shape_cast %43 : vector<4x16x8xf32> to vector<1x4x16x8xf32>
    tpu.vector_store %arg8[%c0_19, %c0_20, %c0_21, %c0_22], %46 {strides = array<i32>} : memref<1x4x16x8xf32, #tpu.memory_space<vmem>>, vector<1x4x16x8xf32>,
    %47 = vector.extract_strided_slice %34 {offsets = [0, 64], sizes = [16, 32], strides = [1, 1]} : vector<16x96xf32> to vector<16x32xf32>
    %48 = vector.shape_cast %47 : vector<16x32xf32> to vector<16x4x8xf32>
    %49 = tpu.transpose %48, [1, 0, 2] : vector<16x4x8xf32> -> vector<4x16x8xf32>
    %c0_23 = arith.constant 0 : index
    %c0_24 = arith.constant 0 : index
    %c0_25 = arith.constant 0 : index
    %c0_26 = arith.constant 0 : index
    %50 = vector.load %arg9[%c0_23, %c0_24, %c0_25, %c0_26] : memref<1x4x16x8xf32, #tpu.memory_space<vmem>>, vector<1x4x16x8xf32>
    %51 = vector.shape_cast %50 : vector<1x4x16x8xf32> to vector<4x16x8xf32>
    %52 = vector.shape_cast %49 : vector<4x16x8xf32> to vector<1x4x16x8xf32>
    tpu.vector_store %arg9[%c0_23, %c0_24, %c0_25, %c0_26], %52 {strides = array<i32>} : memref<1x4x16x8xf32, #tpu.memory_space<vmem>>, vector<1x4x16x8xf32>,
    return
  }
  func.func @transform_0(%arg0: i32, %arg1: i32) -> (i32, i32, i32) {
    %c0_i32 = arith.constant 0 : i32
    %c0_i32_0 = arith.constant 0 : i32
    return %arg0, %arg1, %c0_i32 : i32, i32, i32
  }
  func.func @transform_1(%arg0: i32, %arg1: i32) -> (i32, i32) {
    %c0_i32 = arith.constant 0 : i32
    %c0_i32_0 = arith.constant 0 : i32
    %c0_i32_1 = arith.constant 0 : i32
    return %c0_i32, %c0_i32_0 : i32, i32
  }
  func.func @transform_2(%arg0: i32, %arg1: i32) -> (i32, i32) {
    %c0_i32 = arith.constant 0 : i32
    %c0_i32_0 = arith.constant 0 : i32
    %c0_i32_1 = arith.constant 0 : i32
    return %c0_i32, %c0_i32_0 : i32, i32
  }
  func.func @transform_3(%arg0: i32, %arg1: i32) -> (i32, i32) {
    %c0_i32 = arith.constant 0 : i32
    %c0_i32_0 = arith.constant 0 : i32
    %c0_i32_1 = arith.constant 0 : i32
    return %c0_i32, %c0_i32_0 : i32, i32
  }
  func.func @transform_4(%arg0: i32, %arg1: i32) -> (i32, i32) {
    %c0_i32 = arith.constant 0 : i32
    %c0_i32_0 = arith.constant 0 : i32
    %c0_i32_1 = arith.constant 0 : i32
    return %c0_i32, %c0_i32_0 : i32, i32
  }
  func.func @transform_5(%arg0: i32, %arg1: i32) -> (i32, i32, i32, i32) {
    %c0_i32 = arith.constant 0 : i32
    %c0_i32_0 = arith.constant 0 : i32
    %c0_i32_1 = arith.constant 0 : i32
    return %arg0, %c0_i32, %arg1, %c0_i32_0 : i32, i32, i32, i32
  }
  func.func @transform_6(%arg0: i32, %arg1: i32) -> (i32, i32, i32, i32) {
    %c0_i32 = arith.constant 0 : i32
    %c0_i32_0 = arith.constant 0 : i32
    %c0_i32_1 = arith.constant 0 : i32
    return %arg0, %c0_i32, %arg1, %c0_i32_0 : i32, i32, i32, i32
  }
  func.func @transform_7(%arg0: i32, %arg1: i32) -> (i32, i32, i32, i32) {
    %c0_i32 = arith.constant 0 : i32
    %c0_i32_0 = arith.constant 0 : i32
    %c0_i32_1 = arith.constant 0 : i32
    return %arg0, %c0_i32, %arg1, %c0_i32_0 : i32, i32, i32, i32
  }
}

</mosaic_0001>

<llo_original>
// kernel: tpu_custom_call.1
$region0: #{tpu_custom_call.1}
  #allocation0 [shape = 'u32[]', space=smem, size = 0x4, offset = 0x4, fixed_abs, tag = 'smem constant byte address 0x4 - core index']
  #allocation1 [shape = 'u32[144,128]{1,0:T(1,128)}', space=vmem, size = 0x12000, scoped, tag = 'internal scratch']
  %s0 = inlined_call_operand.hbm [shape: f32[2,16,32], index: 0, kind: input, shape index: {}]
  %s1 = inlined_call_operand.vmem [shape: f32[1,32], index: 1, kind: input, shape index: {}]
  %s2 = inlined_call_operand.vmem [shape: f32[1,32], index: 2, kind: input, shape index: {}]
  %s3 = inlined_call_operand.hbm [shape: f32[32,96], index: 3, kind: input, shape index: {}]
  %s4 = inlined_call_operand.vmem [shape: f32[1,96], index: 4, kind: input, shape index: {}]
  %s5 = inlined_call_operand.vmem [shape: f32[2,4,16,8], index: 5, kind: output, shape index: {0}]
  %s6 = inlined_call_operand.vmem [shape: f32[2,4,16,8], index: 6, kind: output, shape index: {1}]
  %s7 = inlined_call_operand.vmem [shape: f32[2,4,16,8], index: 7, kind: output, shape index: {2}]
  %8 = xla_tuple %s5, %s6, %s7
  %s9 = sld [smem:[#allocation0]]
  $region77: #{tpu_custom_call.1} parent=0
    _
  %s11 = ssub.s32 1, %s9
  %s12 = scalar_select 0, %s11, %s9
  $region1: #{tpu_custom_call.1} parent=0
    #allocation2 [shape = 'u8[16384]{0}', space=vmem, size = 0x4000, scoped, tag = 'input window, operand 0']
    #allocation3 [shape = 's32[2]{0}', space=sflag, size = 0x8, scoped, tag = 'scoped memory for tpu_custom_call.1']
    #allocation4 [shape = 'u8[16384]{0}', space=vmem, size = 0x4000, scoped, tag = 'input window, operand 3, single buffered']
    #allocation5 [shape = 's32[1]{0}', space=sflag, size = 0x4, scoped, tag = 'scoped memory for tpu_custom_call.1']
    %13 = vsyncpa [#allocation3], 0
    %s14 = scalar_lea.sflag [#allocation3], 1
    %15 = vsyncpa %s14, 0
    %16 = vsyncpa [#allocation5], 0
    loop: start=0, step=1, limit=4
    $region2: #{tpu_custom_call.1} parent=1 // loop_pre_header
      _
    $region3: #{tpu_custom_call.1} parent=1 // loop_header
      %s18 = sphi 0, %s22
      %p19 = scmp.ge.s32.totalorder %s18, 4
      %s25 = sphi 0, %s37
      %s26 = sphi 0, %s33
      %s27 = sphi 0, %s25
      %s28 = sphi 0, %s26
      %s29 = sphi 0, %s27
      %s30 = sphi 0, %s28
      %s42 = sphi 0, %s44
      %s45 = sphi 0, %s42
      %s46 = sphi 0, %s45
      %s62 = sphi 0, %s46
      %s66 = sphi 0, %s66
      %s68 = sphi 0, %s66
      %s69 = sphi 0, %s68
      %s83 = sphi 0, %s69
      %s87 = sphi 0, %s87
      %s89 = sphi 0, %s87
      %s90 = sphi 0, %s89
      %s104 = sphi 0, %s90
      %s108 = sphi 0, %s108
      %s110 = sphi 0, %s108
      %s111 = sphi 0, %s110
      %s125 = sphi 0, %s111
      %s129 = sphi 0, %s129
      %s131 = sphi 0, %s129
      %s132 = sphi 0, %s131
      %s146 = sphi 0, %s132
      %s154 = sphi 0, %s156
      %s157 = sphi 0, %s154
      %s158 = sphi 0, %s157
      %s174 = sphi 0, %s158
      %s182 = sphi 0, %s184
      %s185 = sphi 0, %s182
      %s186 = sphi 0, %s185
      %s202 = sphi 0, %s186
      %s210 = sphi 0, %s212
      %s213 = sphi 0, %s210
      %s214 = sphi 0, %s213
      %s230 = sphi 0, %s214
    $region4: #{tpu_custom_call.1} parent=1 // loop_header_branch
      %21 = sbr.rel (%p19) target = $region8
    $region5: #{tpu_custom_call.1} parent=1 // loop_body
      %s23 = ssub.s32 %s18, 1
      %s24 = ssub.s32 %s18, 2
      %s31 = sadd.s32 1, %s26
      %p32 = scmp.ge.s32.totalorder %s31, 1
      %s33 = scalar_select %p32, 0, %s31
      %s34 = sadd.s32 1, %s25
      %s35 = scalar_select %p32, %s34, %s25
      %p36 = scmp.ge.s32.totalorder %s35, 2
      %s37 = scalar_select %p36, 0, %s35
      %s38 = ssub.s32 %s25, %s37
      %s39 = ssub.s32 %s26, %s33
      %s40 = sor.u32 %s38, %s39
      %p41 = scmp.eq.s32.totalorder %s40, 0
      %s43 = sadd.s32 %s42, 1
      %s44 = scalar_select %p41, %s42, %s43
      %p47 = pneg %p41
      %p48 = scmp.eq.s32.totalorder %s18, 1
      %p49 = por %p47, %p48
      %p50 = scmp.ne.s32.totalorder %s42, %s45
      %p51 = scmp.eq.s32.totalorder %s18, 0
      %p52 = por %p50, %p51
      %p53 = scmp.ne.s32.totalorder %s42, %s45
      %p54 = scmp.eq.s32.totalorder %s23, 1
      %p55 = por %p53, %p54
      %p56 = scmp.ne.s32.totalorder %s45, %s46
      %p57 = scmp.eq.s32.totalorder %s23, 0
      %p58 = por %p56, %p57
      %p59 = scmp.ne.s32.totalorder %s45, %s46
      %p60 = scmp.eq.s32.totalorder %s24, 1
      %p61 = por %p59, %p60
      %p63 = scmp.ne.s32.totalorder %s46, %s62
      %p64 = scmp.eq.s32.totalorder %s24, 0
      %p65 = por %p63, %p64
      %s67 = sadd.s32 %s66, 1
      %p70 = scmp.eq.s32.totalorder %s18, 1
      %p71 = scmp.ne.s32.totalorder %s66, %s68
      %p72 = scmp.eq.s32.totalorder %s18, 0
      %p73 = por %p71, %p72
      %p74 = scmp.ne.s32.totalorder %s66, %s68
      %p75 = scmp.eq.s32.totalorder %s23, 1
      %p76 = por %p74, %p75
      %p77 = scmp.ne.s32.totalorder %s68, %s69
      %p78 = scmp.eq.s32.totalorder %s23, 0
      %p79 = por %p77, %p78
      %p80 = scmp.ne.s32.totalorder %s68, %s69
      %p81 = scmp.eq.s32.totalorder %s24, 1
      %p82 = por %p80, %p81
      %p84 = scmp.ne.s32.totalorder %s69, %s83
      %p85 = scmp.eq.s32.totalorder %s24, 0
      %p86 = por %p84, %p85
      %s88 = sadd.s32 %s87, 1
      %p91 = scmp.eq.s32.totalorder %s18, 1
      %p92 = scmp.ne.s32.totalorder %s87, %s89
      %p93 = scmp.eq.s32.totalorder %s18, 0
      %p94 = por %p92, %p93
      %p95 = scmp.ne.s32.totalorder %s87, %s89
      %p96 = scmp.eq.s32.totalorder %s23, 1
      %p97 = por %p95, %p96
      %p98 = scmp.ne.s32.totalorder %s89, %s90
      %p99 = scmp.eq.s32.totalorder %s23, 0
      %p100 = por %p98, %p99
      %p101 = scmp.ne.s32.totalorder %s89, %s90
      %p102 = scmp.eq.s32.totalorder %s24, 1
      %p103 = por %p101, %p102
      %p105 = scmp.ne.s32.totalorder %s90, %s104
      %p106 = scmp.eq.s32.totalorder %s24, 0
      %p107 = por %p105, %p106
      %s109 = sadd.s32 %s108, 1
      %p112 = scmp.eq.s32.totalorder %s18, 1
      %p113 = scmp.ne.s32.totalorder %s108, %s110
      %p114 = scmp.eq.s32.totalorder %s18, 0
      %p115 = por %p113, %p114
      %p116 = scmp.ne.s32.totalorder %s108, %s110
      %p117 = scmp.eq.s32.totalorder %s23, 1
      %p118 = por %p116, %p117
      %p119 = scmp.ne.s32.totalorder %s110, %s111
      %p120 = scmp.eq.s32.totalorder %s23, 0
      %p121 = por %p119, %p120
      %p122 = scmp.ne.s32.totalorder %s110, %s111
      %p123 = scmp.eq.s32.totalorder %s24, 1
      %p124 = por %p122, %p123
      %p126 = scmp.ne.s32.totalorder %s111, %s125
      %p127 = scmp.eq.s32.totalorder %s24, 0
      %p128 = por %p126, %p127
      %s130 = sadd.s32 %s129, 1
      %p133 = scmp.eq.s32.totalorder %s18, 1
      %p134 = scmp.ne.s32.totalorder %s129, %s131
      %p135 = scmp.eq.s32.totalorder %s18, 0
      %p136 = por %p134, %p135
      %p137 = scmp.ne.s32.totalorder %s129, %s131
      %p138 = scmp.eq.s32.totalorder %s23, 1
      %p139 = por %p137, %p138
      %p140 = scmp.ne.s32.totalorder %s131, %s132
      %p141 = scmp.eq.s32.totalorder %s23, 0
      %p142 = por %p140, %p141
      %p143 = scmp.ne.s32.totalorder %s131, %s132
      %p144 = scmp.eq.s32.totalorder %s24, 1
      %p145 = por %p143, %p144
      %p147 = scmp.ne.s32.totalorder %s132, %s146
      %p148 = scmp.eq.s32.totalorder %s24, 0
      %p149 = por %p147, %p148
      %s150 = ssub.s32 %s25, %s37
      %s151 = ssub.s32 %s26, %s33
      %s152 = sor.u32 %s150, %s151
      %p153 = scmp.eq.s32.totalorder %s152, 0
      %s155 = sadd.s32 %s154, 1
      %s156 = scalar_select %p153, %s154, %s155
      %p159 = pneg %p153
      %p160 = scmp.eq.s32.totalorder %s18, 1
      %p161 = por %p159, %p160
      %p162 = scmp.ne.s32.totalorder %s154, %s157
      %p163 = scmp.eq.s32.totalorder %s18, 0
      %p164 = por %p162, %p163
      %p165 = scmp.ne.s32.totalorder %s154, %s157
      %p166 = scmp.eq.s32.totalorder %s23, 1
      %p167 = por %p165, %p166
      %p168 = scmp.ne.s32.totalorder %s157, %s158
      %p169 = scmp.eq.s32.totalorder %s23, 0
      %p170 = por %p168, %p169
      %p171 = scmp.ne.s32.totalorder %s157, %s158
      %p172 = scmp.eq.s32.totalorder %s24, 1
      %p173 = por %p171, %p172
      %p175 = scmp.ne.s32.totalorder %s158, %s174
      %p176 = scmp.eq.s32.totalorder %s24, 0
      %p177 = por %p175, %p176
      %s178 = ssub.s32 %s25, %s37
      %s179 = ssub.s32 %s26, %s33
      %s180 = sor.u32 %s178, %s179
      %p181 = scmp.eq.s32.totalorder %s180, 0
      %s183 = sadd.s32 %s182, 1
      %s184 = scalar_select %p181, %s182, %s183
      %p187 = pneg %p181
      %p188 = scmp.eq.s32.totalorder %s18, 1
      %p189 = por %p187, %p188
      %p190 = scmp.ne.s32.totalorder %s182, %s185
      %p191 = scmp.eq.s32.totalorder %s18, 0
      %p192 = por %p190, %p191
      %p193 = scmp.ne.s32.totalorder %s182, %s185
      %p194 = scmp.eq.s32.totalorder %s23, 1
      %p195 = por %p193, %p194
      %p196 = scmp.ne.s32.totalorder %s185, %s186
      %p197 = scmp.eq.s32.totalorder %s23, 0
      %p198 = por %p196, %p197
      %p199 = scmp.ne.s32.totalorder %s185, %s186
      %p200 = scmp.eq.s32.totalorder %s24, 1
      %p201 = por %p199, %p200
      %p203 = scmp.ne.s32.totalorder %s186, %s202
      %p204 = scmp.eq.s32.totalorder %s24, 0
      %p205 = por %p203, %p204
      %s206 = ssub.s32 %s25, %s37
      %s207 = ssub.s32 %s26, %s33
      %s208 = sor.u32 %s206, %s207
      %p209 = scmp.eq.s32.totalorder %s208, 0
      %s211 = sadd.s32 %s210, 1
      %s212 = scalar_select %p209, %s210, %s211
      %p215 = pneg %p209
      %p216 = scmp.eq.s32.totalorder %s18, 1
      %p217 = por %p215, %p216
      %p218 = scmp.ne.s32.totalorder %s210, %s213
      %p219 = scmp.eq.s32.totalorder %s18, 0
      %p220 = por %p218, %p219
      %p221 = scmp.ne.s32.totalorder %s210, %s213
      %p222 = scmp.eq.s32.totalorder %s23, 1
      %p223 = por %p221, %p222
      %p224 = scmp.ne.s32.totalorder %s213, %s214
      %p225 = scmp.eq.s32.totalorder %s23, 0
      %p226 = por %p224, %p225
      %p227 = scmp.ne.s32.totalorder %s213, %s214
      %p228 = scmp.eq.s32.totalorder %s24, 1
      %p229 = por %p227, %p228
      %p231 = scmp.ne.s32.totalorder %s214, %s230
      %p232 = scmp.eq.s32.totalorder %s24, 0
      %p233 = por %p231, %p232
      %p234 = scmp.le.s32.totalorder 1, %s18
      %p235 = scmp.lt.s32.totalorder %s18, 3
      %p236 = pnand %p234, %p235
      %p237 = pneg %p236
      // Predicated region
      $region9: #{tpu_custom_call.1} parent=5 // pred_check
        _
      $region10: #{tpu_custom_call.1} parent=5 // pred_check_branch
        %239 = sbr.rel (%p236) target = $region12
      $region11: #{tpu_custom_call.1} parent=5 // pred_region
        %s240 = ssub.s32 %s18, 1
        // Predicated region
        $region13: #{tpu_custom_call.1} parent=11 // pred_check
          %p241 = pneg %p79
        $region14: #{tpu_custom_call.1} parent=11 // pred_check_branch
          %243 = sbr.rel (%p241) target = $region16
        $region15: #{tpu_custom_call.1} parent=11 // pred_region
          _
        $region16: #{tpu_custom_call.1} parent=11 // pred_fallthru
          _
        // Predicated region
        $region17: #{tpu_custom_call.1} parent=11 // pred_check
          %p244 = pneg %p100
        $region18: #{tpu_custom_call.1} parent=11 // pred_check_branch
          %246 = sbr.rel (%p244) target = $region20
        $region19: #{tpu_custom_call.1} parent=11 // pred_region
          _
        $region20: #{tpu_custom_call.1} parent=11 // pred_fallthru
          _
        // Predicated region
        $region21: #{tpu_custom_call.1} parent=11 // pred_check
          %p247 = pneg %p121
        $region22: #{tpu_custom_call.1} parent=11 // pred_check_branch
          %249 = sbr.rel (%p247) target = $region24
        $region23: #{tpu_custom_call.1} parent=11 // pred_region
          %s251 = ssub.s32 512, 512
          %252 = vsyncadd [#allocation5], %s251
          %s253 = sshll.u32 [#allocation4], 4
          %s254 = int_to_ptr.vmem [resolvable:$true] %s253
          %259 = dma.hbm_to_vmem [thread:$0]  %s3, 512, %s254, [#allocation5], 128, 128, 8
        $region24: #{tpu_custom_call.1} parent=11 // pred_fallthru
          _
        // Predicated region
        $region25: #{tpu_custom_call.1} parent=11 // pred_check
          %p260 = pneg %p142
        $region26: #{tpu_custom_call.1} parent=11 // pred_check_branch
          %262 = sbr.rel (%p260) target = $region28
        $region27: #{tpu_custom_call.1} parent=11 // pred_region
          _
        $region28: #{tpu_custom_call.1} parent=11 // pred_fallthru
          _
      $region12: #{tpu_custom_call.1} parent=5 // pred_fallthru
        _
      %p263 = scmp.lt.s32.totalorder %s18, 2
      // Predicated region
      $region29: #{tpu_custom_call.1} parent=5 // pred_check
        %p264 = pneg %p263
      $region30: #{tpu_custom_call.1} parent=5 // pred_check_branch
        %266 = sbr.rel (%p264) target = $region32
      $region31: #{tpu_custom_call.1} parent=5 // pred_region
        // Predicated region
        $region33: #{tpu_custom_call.1} parent=31 // pred_check
          %p267 = pneg %p52
        $region34: #{tpu_custom_call.1} parent=31 // pred_check_branch
          %269 = sbr.rel (%p267) target = $region36
        $region35: #{tpu_custom_call.1} parent=31 // pred_region
          %s270 = sand.u32 %s42, 1
          %s271 = scalar_lea.sflag [#allocation3], %s270
          %s272 = sand.u32 %s42, 1
          %s273 = smul.addr %s272, 16
          %s274 = scalar_lea.vmem [#allocation2], %s273
          %s275 = smul.u32 2, %s26
          %s277 = ssub.s32 256, 256
          %278 = vsyncadd %s271, %s277
          %s279 = smul.addr %s25, 2
          %s280 = sadd.s32 %s275, %s279
          %s281 = smul.addr %s280, 128
          %s282 = scalar_lea.hbm %s0, %s281
          %s283 = sshll.u32 %s274, 4
          %s284 = int_to_ptr.vmem [resolvable:$true] %s283
          %289 = dma.hbm_to_vmem [thread:$0]  %s282, 256, %s284, %s271, 128, 128, 8
        $region36: #{tpu_custom_call.1} parent=31 // pred_fallthru
          _
      $region32: #{tpu_custom_call.1} parent=5 // pred_fallthru
        _
      %p290 = scmp.le.s32.totalorder 1, %s18
      %p291 = scmp.lt.s32.totalorder %s18, 3
      %p292 = pnand %p290, %p291
      %p293 = pneg %p292
      // Predicated region
      $region37: #{tpu_custom_call.1} parent=5 // pred_check
        _
      $region38: #{tpu_custom_call.1} parent=5 // pred_check_branch
        %295 = sbr.rel (%p292) target = $region40
      $region39: #{tpu_custom_call.1} parent=5 // pred_region
        %s296 = ssub.s32 %s18, 1
        %s297 = sand.u32 %s45, 1
        %s298 = scalar_lea.sflag [#allocation3], %s297
        %s299 = sand.u32 %s45, 1
        %s300 = smul.addr %s299, 16
        %s301 = scalar_lea.vmem [#allocation2], %s300
        // Predicated region
        $region41: #{tpu_custom_call.1} parent=39 // pred_check
          %p302 = pneg %p58
        $region42: #{tpu_custom_call.1} parent=39 // pred_check_branch
          %304 = sbr.rel (%p302) target = $region44
        $region43: #{tpu_custom_call.1} parent=39 // pred_region
          %305 = dma.done %s298, 256
        $region44: #{tpu_custom_call.1} parent=39 // pred_fallthru
          _
        // Predicated region
        $region45: #{tpu_custom_call.1} parent=39 // pred_check
          %p306 = pneg %p121
        $region46: #{tpu_custom_call.1} parent=39 // pred_check_branch
          %308 = sbr.rel (%p306) target = $region48
        $region47: #{tpu_custom_call.1} parent=39 // pred_region
          %309 = dma.done [#allocation5], 512
        $region48: #{tpu_custom_call.1} parent=39 // pred_fallthru
          _
        %s310 = sand.u32 %s45, 1
        %s311 = scalar_lea.sflag [#allocation3], %s310
        %s312 = sand.u32 %s45, 1
        %s313 = smul.addr %s312, 16
        %s314 = scalar_lea.vmem [#allocation2], %s313
        %p315 = pneg %p58
        %p316 = pneg %p55
        %p317 = pneg %p79
        %p318 = pneg %p76
        %p319 = pneg %p100
        %p320 = pneg %p97
        %p321 = pneg %p121
        %p322 = pneg %p118
        %p323 = pneg %p142
        %p324 = pneg %p139
        %p325 = pneg %p170
        %p326 = pneg %p167
        %s327 = smul.u32 2, %s28
        %p328 = scmp.lt.s32.totalorder %s27, 1
        %s329 = scalar_select %p328, %s27, 1
        %p330 = scmp.lt.s32.totalorder %s327, 1
        %s331 = scalar_select %p330, %s327, 1
        %s332 = smul.addr %s329, 8
        %s333 = sadd.s32 %s331, %s332
        %s334 = smul.addr %s333, 8
        %s335 = scalar_lea.vmem %s5, %s334
        %p336 = pneg %p198
        %p337 = pneg %p195
        %s338 = smul.u32 2, %s28
        %p339 = scmp.lt.s32.totalorder %s27, 1
        %s340 = scalar_select %p339, %s27, 1
        %p341 = scmp.lt.s32.totalorder %s338, 1
        %s342 = scalar_select %p341, %s338, 1
        %s343 = smul.addr %s340, 8
        %s344 = sadd.s32 %s342, %s343
        %s345 = smul.addr %s344, 8
        %s346 = scalar_lea.vmem %s6, %s345
        %p347 = pneg %p226
        %p348 = pneg %p223
        %s349 = smul.u32 2, %s28
        %p350 = scmp.lt.s32.totalorder %s27, 1
        %s351 = scalar_select %p350, %s27, 1
        %p352 = scmp.lt.s32.totalorder %s349, 1
        %s353 = scalar_select %p352, %s349, 1
        %s354 = smul.addr %s351, 8
        %s355 = sadd.s32 %s353, %s354
        %s356 = smul.addr %s355, 8
        %s357 = scalar_lea.vmem %s7, %s356
        %s358 = smul.u32 2, %s28
        %s359 = smul.u32 2, %s28
        %p360 = scmp.lt.s32.totalorder %s27, 1
        %s361 = scalar_select %p360, %s27, 1
        %p362 = scmp.lt.s32.totalorder %s359, 1
        %s363 = scalar_select %p362, %s359, 1
        %s364 = smul.addr %s361, 8
        %s365 = sadd.s32 %s363, %s364
        %s366 = smul.addr %s365, 8
        %s367 = scalar_lea.vmem %s5, %s366
        %s368 = smul.u32 2, %s28
        %s369 = smul.u32 2, %s28
        %p370 = scmp.lt.s32.totalorder %s27, 1
        %s371 = scalar_select %p370, %s27, 1
        %p372 = scmp.lt.s32.totalorder %s369, 1
        %s373 = scalar_select %p372, %s369, 1
        %s374 = smul.addr %s371, 8
        %s375 = sadd.s32 %s373, %s374
        %s376 = smul.addr %s375, 8
        %s377 = scalar_lea.vmem %s6, %s376
        %s378 = smul.u32 2, %s28
        %s379 = smul.u32 2, %s28
        %p380 = scmp.lt.s32.totalorder %s27, 1
        %s381 = scalar_select %p380, %s27, 1
        %p382 = scmp.lt.s32.totalorder %s379, 1
        %s383 = scalar_select %p382, %s379, 1
        %s384 = smul.addr %s381, 8
        %s385 = sadd.s32 %s383, %s384
        %s386 = smul.addr %s385, 8
        %s387 = scalar_lea.vmem %s7, %s386
        %s388 = smul.u32 2, %s28
        %v389 = vld [vmem:[%s301] sm:$0xff]
        %v390 = vld [vmem:[%s301 + $0x8] sm:$0xff]
        %v391 = vld [vmem:[%s1] sm:$0x1]
        %v392 = vld [vmem:[%s2] sm:$0x1]
        %vm393 = vcmask 261120
        %v394 = vsel %vm393, %v389, 0.0
        %395 = vadd.xlane.f32.xlu0 %v394
        %v396 = vpop.xlane.xlu0 %395
        %v397 = vsel %vm393, %v390, 0.0
        %398 = vadd.xlane.f32.xlu0 %v397
        %v399 = vpop.xlane.xlu0 %398
        %v400 = vrcp.pop 32.0
        %v401 = vmul.f32 %v396, %v400
        %v402 = vmul.f32 %v399, %v400
        %v403 = vsub.f32 %v389, %v401
        %v404 = vsub.f32 %v390, %v402
        %v405 = vmul.f32 %v403, %v403
        %v406 = vmul.f32 %v404, %v404
        %v407 = vsel %vm393, %v405, 0.0
        %408 = vadd.xlane.f32.xlu0 %v407
        %v409 = vpop.xlane.xlu0 %408
        %v410 = vsel %vm393, %v406, 0.0
        %411 = vadd.xlane.f32.xlu0 %v410
        %v412 = vpop.xlane.xlu0 %411
        %v413 = vmul.f32 %v409, %v400
        %v414 = vmul.f32 %v412, %v400
        %v415 = vadd.f32 %v413, 1e-05
        %v416 = vadd.f32 %v414, 1e-05
        %v417 = vrsqrt.pop %v415
        %v418 = vrsqrt.pop %v416
        %v419 = vmul.f32 %v403, %v417
        %v420 = vmul.f32 %v404, %v418
        %v422 = vlaneseq
        %v423 = vshrl.u32 %v422, 7
        %v424 = vsub.s32 0, %v423
        %v425 = vrot.slane %v391, %v424
        %v427 = vmul.f32 %v419, %v425
        %v428 = vmul.f32 %v420, %v425
        %v430 = vlaneseq
        %v431 = vshrl.u32 %v430, 7
        %v432 = vsub.s32 0, %v431
        %v433 = vrot.slane %v392, %v432
        %v435 = vadd.f32 %v427, %v433
        %v436 = vadd.f32 %v428, %v433
        %v437 = vld [vmem:[#allocation4] sm:$0xff]
        %v438 = vld [vmem:[#allocation4 + $0x8] sm:$0xff]
        %v439 = vld [vmem:[#allocation4 + $0x10] sm:$0xff]
        %v440 = vld [vmem:[#allocation4 + $0x18] sm:$0xff]
        %v441 = vld [vmem:[%s4] sm:$0x1]
        %v443 = vlaneseq
        %v444 = vshrl.u32 %v443, 7
        %v445 = vsub.s32 0, %v444
        %v446 = vrot.slane %v441, %v445
        %v449 = vsel %vm393, %v435, 0
        %v452 = vsel %vm393, %v436, 0
        %454 = vmatprep.subr.mxu0 0.0
        %455 = vmatpush1.msra.mxu0 0.0
        %456 = vmatprep.subr.mxu0 0.0
        %457 = vmatpush1.msra.mxu0 0.0
        %458 = vmatprep.subr.mxu0 0.0
        %459 = vmatpush1.msra.mxu0 0.0
        %460 = vmatprep.subr.mxu0 0.0
        %461 = vmatpush1.msra.mxu0 0.0
        %462 = vmatprep.subr.mxu0 0.0
        %463 = vmatpush1.msra.mxu0 0.0
        %464 = vmatprep.subr.mxu0 0.0
        %465 = vmatpush1.msra.mxu0 0.0
        %466 = vmatprep.subr.mxu0 0.0
        %467 = vmatpush1.msra.mxu0 0.0
        %468 = vmatprep.subr.mxu0 0.0
        %469 = vmatpush1.msra.mxu0 0.0
        %470 = vmatprep.subr.mxu0 0.0
        %471 = vmatpush1.msra.mxu0 0.0
        %472 = vmatprep.subr.mxu0 0.0
        %473 = vmatpush1.msra.mxu0 0.0
        %474 = vmatprep.subr.mxu0 0.0
        %475 = vmatpush1.msra.mxu0 0.0
        %476 = vmatprep.subr.mxu0 0.0
        %477 = vmatpush1.msra.mxu0 0.0
        %478 = vmatprep.subr.mxu0 0.0
        %479 = vmatpush1.msra.mxu0 %v440
        %480 = vmatprep.subr.mxu0 0.0
        %481 = vmatpush1.msra.mxu0 %v439
        %482 = vmatprep.subr.mxu0 0.0
        %483 = vmatpush1.msra.mxu0 %v438
        %484 = vmatprep.subr.mxu0 0.0
        %485 = vmatpush1.msra.mxu0 %v437
        %486 = vmatprep.subr.mxu0 0.0
        %487 = vmatpush2.msra.mxu0 0.0
        %488 = vmatprep.subr.mxu0 0.0
        %489 = vmatpush2.msra.mxu0 0.0
        %490 = vmatprep.subr.mxu0 0.0
        %491 = vmatpush2.msra.mxu0 0.0
        %492 = vmatprep.subr.mxu0 0.0
        %493 = vmatpush2.msra.mxu0 0.0
        %494 = vmatprep.subr.mxu0 0.0
        %495 = vmatpush2.msra.mxu0 0.0
        %496 = vmatprep.subr.mxu0 0.0
        %497 = vmatpush2.msra.mxu0 0.0
        %498 = vmatprep.subr.mxu0 0.0
        %499 = vmatpush2.msra.mxu0 0.0
        %500 = vmatprep.subr.mxu0 0.0
        %501 = vmatpush2.msra.mxu0 0.0
        %502 = vmatprep.subr.mxu0 0.0
        %503 = vmatpush2.msra.mxu0 0.0
        %504 = vmatprep.subr.mxu0 0.0
        %505 = vmatpush2.msra.mxu0 0.0
        %506 = vmatprep.subr.mxu0 0.0
        %507 = vmatpush2.msra.mxu0 0.0
        %508 = vmatprep.subr.mxu0 0.0
        %509 = vmatpush2.msra.mxu0 0.0
        %510 = vmatprep.subr.mxu0 0.0
        %511 = vmatpush2.msra.mxu0 0.0
        %512 = vmatprep.subr.mxu0 0.0
        %513 = vmatpush2.msra.mxu0 0.0
        %514 = vmatprep.subr.mxu0 0.0
        %515 = vmatpush2.msra.mxu0 0.0
        %516 = vmatprep.subr.mxu0 0.0
        %517 = vmatpush2.msra.mxu0 0.0
        %518 = vmatprep.mubr.f32.mxu0 0.0
        %519 = vmatmul.mubr.f32.gmra.mxu0 %v449
        %v520 = vpop.f32.mrf.mxu0
        %v521 = vadd.f32 %v446, %v520
        %v522 = vpop.f32.mrf.mxu0
        %523 = vmatprep.mubr.f32.mxu0 0.0
        %524 = vmatmul.mubr.f32.gmra.mxu0 %v452
        %v525 = vpop.f32.mrf.mxu0
        %v526 = vadd.f32 %v446, %v525
        %v527 = vpop.f32.mrf.mxu0
        %528 = vdwg.mxu0
        %531 = vrot.lane.b32.xlu0 %v521, 120
        %v532 = vpop.permute.xlu0 %531
        %533 = vrot.lane.b32.xlu0 %v526, 120
        %v534 = vpop.permute.xlu0 %533
        %537 = vrot.lane.b32.xlu0 %v521, 112
        %v538 = vpop.permute.xlu0 %537
        %539 = vrot.lane.b32.xlu0 %v526, 112
        %v540 = vpop.permute.xlu0 %539
        %543 = vrot.lane.b32.xlu0 %v521, 104
        %v544 = vpop.permute.xlu0 %543
        %545 = vrot.lane.b32.xlu0 %v526, 104
        %v546 = vpop.permute.xlu0 %545
        %v549 = vcombine.low %v521, %v538
        %v550 = vcombine.high %v521, %v538
        %v552 = vunpack.c.l.s4 1983009808
        %v553 = vunpack.c.0.s8 %v552
        %v554 = vlaneseq
        %v555 = vshrl.u32 %v554, 7
        %v556 = vsub.s32 %v553, %v555
        %v557 = vrot.slane %v549, %v556
        %v559 = vunpack.c.l.s4 1983009808
        %v560 = vunpack.c.0.s8 %v559
        %v561 = vlaneseq
        %v562 = vshrl.u32 %v561, 7
        %v563 = vsub.s32 %v560, %v562
        %v564 = vrot.slane %v550, %v563
        %v565 = vcombine.low %v532, %v544
        %v566 = vcombine.high %v532, %v544
        %v568 = vunpack.c.l.s4 1983009808
        %v569 = vunpack.c.0.s8 %v568
        %v570 = vlaneseq
        %v571 = vshrl.u32 %v570, 7
        %v572 = vsub.s32 %v569, %v571
        %v573 = vrot.slane %v565, %v572
        %v575 = vunpack.c.l.s4 1983009808
        %v576 = vunpack.c.0.s8 %v575
        %v577 = vlaneseq
        %v578 = vshrl.u32 %v577, 7
        %v579 = vsub.s32 %v576, %v578
        %v580 = vrot.slane %v566, %v579
        %v581 = vcombine.low %v557, %v573
        %v582 = vcombine.high %v557, %v573
        %v584 = vunpack.c.l.s4 1934713408
        %v585 = vunpack.c.0.s8 %v584
        %v586 = vlaneseq
        %v587 = vshrl.u32 %v586, 7
        %v588 = vsub.s32 %v585, %v587
        %v589 = vrot.slane %v581, %v588
        %v591 = vunpack.c.l.s4 1934713408
        %v592 = vunpack.c.0.s8 %v591
        %v593 = vlaneseq
        %v594 = vshrl.u32 %v593, 7
        %v595 = vsub.s32 %v592, %v594
        %v596 = vrot.slane %v582, %v595
        %v597 = vcombine.low %v564, %v580
        %v598 = vcombine.high %v564, %v580
        %v600 = vunpack.c.l.s4 1934713408
        %v601 = vunpack.c.0.s8 %v600
        %v602 = vlaneseq
        %v603 = vshrl.u32 %v602, 7
        %v604 = vsub.s32 %v601, %v603
        %v605 = vrot.slane %v597, %v604
        %v607 = vunpack.c.l.s4 1934713408
        %v608 = vunpack.c.0.s8 %v607
        %v609 = vlaneseq
        %v610 = vshrl.u32 %v609, 7
        %v611 = vsub.s32 %v608, %v610
        %v612 = vrot.slane %v598, %v611
        %v613 = vcombine.high %v589, 0.0
        %v614 = vcombine.high %v596, 0.0
        %v615 = vcombine.high %v605, 0.0
        %v616 = vcombine.high %v612, 0.0
        %v617 = vcombine.low %v526, %v540
        %v618 = vcombine.high %v526, %v540
        %v620 = vunpack.c.l.s4 1983009808
        %v621 = vunpack.c.0.s8 %v620
        %v622 = vlaneseq
        %v623 = vshrl.u32 %v622, 7
        %v624 = vsub.s32 %v621, %v623
        %v625 = vrot.slane %v617, %v624
        %v627 = vunpack.c.l.s4 1983009808
        %v628 = vunpack.c.0.s8 %v627
        %v629 = vlaneseq
        %v630 = vshrl.u32 %v629, 7
        %v631 = vsub.s32 %v628, %v630
        %v632 = vrot.slane %v618, %v631
        %v633 = vcombine.low %v534, %v546
        %v634 = vcombine.high %v534, %v546
        %v636 = vunpack.c.l.s4 1983009808
        %v637 = vunpack.c.0.s8 %v636
        %v638 = vlaneseq
        %v639 = vshrl.u32 %v638, 7
        %v640 = vsub.s32 %v637, %v639
        %v641 = vrot.slane %v633, %v640
        %v643 = vunpack.c.l.s4 1983009808
        %v644 = vunpack.c.0.s8 %v643
        %v645 = vlaneseq
        %v646 = vshrl.u32 %v645, 7
        %v647 = vsub.s32 %v644, %v646
        %v648 = vrot.slane %v634, %v647
        %v649 = vcombine.low %v625, %v641
        %v650 = vcombine.high %v625, %v641
        %v652 = vunpack.c.l.s4 1934713408
        %v653 = vunpack.c.0.s8 %v652
        %v654 = vlaneseq
        %v655 = vshrl.u32 %v654, 7
        %v656 = vsub.s32 %v653, %v655
        %v657 = vrot.slane %v649, %v656
        %v659 = vunpack.c.l.s4 1934713408
        %v660 = vunpack.c.0.s8 %v659
        %v661 = vlaneseq
        %v662 = vshrl.u32 %v661, 7
        %v663 = vsub.s32 %v660, %v662
        %v664 = vrot.slane %v650, %v663
        %v665 = vcombine.low %v632, %v648
        %v666 = vcombine.high %v632, %v648
        %v668 = vunpack.c.l.s4 1934713408
        %v669 = vunpack.c.0.s8 %v668
        %v670 = vlaneseq
        %v671 = vshrl.u32 %v670, 7
        %v672 = vsub.s32 %v669, %v671
        %v673 = vrot.slane %v665, %v672
        %v675 = vunpack.c.l.s4 1934713408
        %v676 = vunpack.c.0.s8 %v675
        %v677 = vlaneseq
        %v678 = vshrl.u32 %v677, 7
        %v679 = vsub.s32 %v676, %v678
        %v680 = vrot.slane %v666, %v679
        %v681 = vcombine.high %v657, 0.0
        %v682 = vcombine.high %v664, 0.0
        %v683 = vcombine.high %v673, 0.0
        %v684 = vcombine.high %v680, 0.0
        %v685 = vcombine.low %v589, %v596
        %v687 = vunpack.c.l.s4 1983009808
        %v688 = vunpack.c.0.s8 %v687
        %v689 = vlaneseq
        %v690 = vshrl.u32 %v689, 7
        %v691 = vsub.s32 %v688, %v690
        %v692 = vrot.slane %v685, %v691
        %v693 = vcombine.low %v613, %v614
        %v695 = vunpack.c.l.s4 1983009808
        %v696 = vunpack.c.0.s8 %v695
        %v697 = vlaneseq
        %v698 = vshrl.u32 %v697, 7
        %v699 = vsub.s32 %v696, %v698
        %v700 = vrot.slane %v693, %v699
        %v701 = vcombine.low %v605, %v612
        %v703 = vunpack.c.l.s4 1983009808
        %v704 = vunpack.c.0.s8 %v703
        %v705 = vlaneseq
        %v706 = vshrl.u32 %v705, 7
        %v707 = vsub.s32 %v704, %v706
        %v708 = vrot.slane %v701, %v707
        %v709 = vcombine.low %v615, %v616
        %v711 = vunpack.c.l.s4 1983009808
        %v712 = vunpack.c.0.s8 %v711
        %v713 = vlaneseq
        %v714 = vshrl.u32 %v713, 7
        %v715 = vsub.s32 %v712, %v714
        %v716 = vrot.slane %v709, %v715
        %v717 = vcombine.low %v692, %v700
        %v718 = vcombine.high %v692, %v700
        %v720 = vunpack.c.l.s4 1934713408
        %v721 = vunpack.c.0.s8 %v720
        %v722 = vlaneseq
        %v723 = vshrl.u32 %v722, 7
        %v724 = vsub.s32 %v721, %v723
        %v725 = vrot.slane %v717, %v724
        %v727 = vunpack.c.l.s4 1934713408
        %v728 = vunpack.c.0.s8 %v727
        %v729 = vlaneseq
        %v730 = vshrl.u32 %v729, 7
        %v731 = vsub.s32 %v728, %v730
        %v732 = vrot.slane %v718, %v731
        %v733 = vcombine.low %v708, %v716
        %v734 = vcombine.high %v708, %v716
        %v736 = vunpack.c.l.s4 1934713408
        %v737 = vunpack.c.0.s8 %v736
        %v738 = vlaneseq
        %v739 = vshrl.u32 %v738, 7
        %v740 = vsub.s32 %v737, %v739
        %v741 = vrot.slane %v733, %v740
        %v743 = vunpack.c.l.s4 1934713408
        %v744 = vunpack.c.0.s8 %v743
        %v745 = vlaneseq
        %v746 = vshrl.u32 %v745, 7
        %v747 = vsub.s32 %v744, %v746
        %v748 = vrot.slane %v734, %v747
        %v749 = vcombine.low %v725, %v741
        %v750 = vcombine.high %v725, %v741
        %v751 = vcombine.low %v732, %v748
        %v752 = vcombine.high %v732, %v748
        %v753 = vcombine.low %v657, %v664
        %v755 = vunpack.c.l.s4 1983009808
        %v756 = vunpack.c.0.s8 %v755
        %v757 = vlaneseq
        %v758 = vshrl.u32 %v757, 7
        %v759 = vsub.s32 %v756, %v758
        %v760 = vrot.slane %v753, %v759
        %v761 = vcombine.low %v681, %v682
        %v763 = vunpack.c.l.s4 1983009808
        %v764 = vunpack.c.0.s8 %v763
        %v765 = vlaneseq
        %v766 = vshrl.u32 %v765, 7
        %v767 = vsub.s32 %v764, %v766
        %v768 = vrot.slane %v761, %v767
        %v769 = vcombine.low %v673, %v680
        %v771 = vunpack.c.l.s4 1983009808
        %v772 = vunpack.c.0.s8 %v771
        %v773 = vlaneseq
        %v774 = vshrl.u32 %v773, 7
        %v775 = vsub.s32 %v772, %v774
        %v776 = vrot.slane %v769, %v775
        %v777 = vcombine.low %v683, %v684
        %v779 = vunpack.c.l.s4 1983009808
        %v780 = vunpack.c.0.s8 %v779
        %v781 = vlaneseq
        %v782 = vshrl.u32 %v781, 7
        %v783 = vsub.s32 %v780, %v782
        %v784 = vrot.slane %v777, %v783
        %v785 = vcombine.low %v760, %v768
        %v786 = vcombine.high %v760, %v768
        %v788 = vunpack.c.l.s4 1934713408
        %v789 = vunpack.c.0.s8 %v788
        %v790 = vlaneseq
        %v791 = vshrl.u32 %v790, 7
        %v792 = vsub.s32 %v789, %v791
        %v793 = vrot.slane %v785, %v792
        %v795 = vunpack.c.l.s4 1934713408
        %v796 = vunpack.c.0.s8 %v795
        %v797 = vlaneseq
        %v798 = vshrl.u32 %v797, 7
        %v799 = vsub.s32 %v796, %v798
        %v800 = vrot.slane %v786, %v799
        %v801 = vcombine.low %v776, %v784
        %v802 = vcombine.high %v776, %v784
        %v804 = vunpack.c.l.s4 1934713408
        %v805 = vunpack.c.0.s8 %v804
        %v806 = vlaneseq
        %v807 = vshrl.u32 %v806, 7
        %v808 = vsub.s32 %v805, %v807
        %v809 = vrot.slane %v801, %v808
        %v811 = vunpack.c.l.s4 1934713408
        %v812 = vunpack.c.0.s8 %v811
        %v813 = vlaneseq
        %v814 = vshrl.u32 %v813, 7
        %v815 = vsub.s32 %v812, %v814
        %v816 = vrot.slane %v802, %v815
        %v817 = vcombine.low %v793, %v809
        %v818 = vcombine.high %v793, %v809
        %v819 = vcombine.low %v800, %v816
        %v820 = vcombine.high %v800, %v816
        %vm821 = vcmask 64512
        %822 = vst.msk [vmem:[%s367] sm:$0xff] %vm821, %v749
        %823 = vst.msk [vmem:[%s367 + $0x8] sm:$0xff] %vm821, %v817
        %824 = vst.msk [vmem:[%s367 + $0x10] sm:$0xff] %vm821, %v750
        %825 = vst.msk [vmem:[%s367 + $0x18] sm:$0xff] %vm821, %v818
        %826 = vst.msk [vmem:[%s367 + $0x20] sm:$0xff] %vm821, %v751
        %827 = vst.msk [vmem:[%s367 + $0x28] sm:$0xff] %vm821, %v819
        %828 = vst.msk [vmem:[%s367 + $0x30] sm:$0xff] %vm821, %v752
        %829 = vst.msk [vmem:[%s367 + $0x38] sm:$0xff] %vm821, %v820
        %830 = vrot.lane.b32.xlu0 %v521, 96
        %v831 = vpop.permute.xlu0 %830
        %832 = vrot.lane.b32.xlu0 %v526, 96
        %v833 = vpop.permute.xlu0 %832
        %834 = vrot.lane.b32.xlu0 %v532, 96
        %v835 = vpop.permute.xlu0 %834
        %836 = vrot.lane.b32.xlu0 %v534, 96
        %v837 = vpop.permute.xlu0 %836
        %838 = vrot.lane.b32.xlu0 %v538, 96
        %v839 = vpop.permute.xlu0 %838
        %840 = vrot.lane.b32.xlu0 %v540, 96
        %v841 = vpop.permute.xlu0 %840
        %842 = vrot.lane.b32.xlu0 %v544, 96
        %v843 = vpop.permute.xlu0 %842
        %844 = vrot.lane.b32.xlu0 %v546, 96
        %v845 = vpop.permute.xlu0 %844
        %v854 = vcombine.low %v831, %v839
        %v855 = vcombine.high %v831, %v839
        %v857 = vunpack.c.l.s4 1983009808
        %v858 = vunpack.c.0.s8 %v857
        %v859 = vlaneseq
        %v860 = vshrl.u32 %v859, 7
        %v861 = vsub.s32 %v858, %v860
        %v862 = vrot.slane %v854, %v861
        %v864 = vunpack.c.l.s4 1983009808
        %v865 = vunpack.c.0.s8 %v864
        %v866 = vlaneseq
        %v867 = vshrl.u32 %v866, 7
        %v868 = vsub.s32 %v865, %v867
        %v869 = vrot.slane %v855, %v868
        %v870 = vcombine.low %v835, %v843
        %v871 = vcombine.high %v835, %v843
        %v873 = vunpack.c.l.s4 1983009808
        %v874 = vunpack.c.0.s8 %v873
        %v875 = vlaneseq
        %v876 = vshrl.u32 %v875, 7
        %v877 = vsub.s32 %v874, %v876
        %v878 = vrot.slane %v870, %v877
        %v880 = vunpack.c.l.s4 1983009808
        %v881 = vunpack.c.0.s8 %v880
        %v882 = vlaneseq
        %v883 = vshrl.u32 %v882, 7
        %v884 = vsub.s32 %v881, %v883
        %v885 = vrot.slane %v871, %v884
        %v886 = vcombine.low %v862, %v878
        %v887 = vcombine.high %v862, %v878
        %v889 = vunpack.c.l.s4 1934713408
        %v890 = vunpack.c.0.s8 %v889
        %v891 = vlaneseq
        %v892 = vshrl.u32 %v891, 7
        %v893 = vsub.s32 %v890, %v892
        %v894 = vrot.slane %v886, %v893
        %v896 = vunpack.c.l.s4 1934713408
        %v897 = vunpack.c.0.s8 %v896
        %v898 = vlaneseq
        %v899 = vshrl.u32 %v898, 7
        %v900 = vsub.s32 %v897, %v899
        %v901 = vrot.slane %v887, %v900
        %v902 = vcombine.low %v869, %v885
        %v903 = vcombine.high %v869, %v885
        %v905 = vunpack.c.l.s4 1934713408
        %v906 = vunpack.c.0.s8 %v905
        %v907 = vlaneseq
        %v908 = vshrl.u32 %v907, 7
        %v909 = vsub.s32 %v906, %v908
        %v910 = vrot.slane %v902, %v909
        %v912 = vunpack.c.l.s4 1934713408
        %v913 = vunpack.c.0.s8 %v912
        %v914 = vlaneseq
        %v915 = vshrl.u32 %v914, 7
        %v916 = vsub.s32 %v913, %v915
        %v917 = vrot.slane %v903, %v916
        %v918 = vcombine.high %v894, 0.0
        %v919 = vcombine.high %v901, 0.0
        %v920 = vcombine.high %v910, 0.0
        %v921 = vcombine.high %v917, 0.0
        %v922 = vcombine.low %v833, %v841
        %v923 = vcombine.high %v833, %v841
        %v925 = vunpack.c.l.s4 1983009808
        %v926 = vunpack.c.0.s8 %v925
        %v927 = vlaneseq
        %v928 = vshrl.u32 %v927, 7
        %v929 = vsub.s32 %v926, %v928
        %v930 = vrot.slane %v922, %v929
        %v932 = vunpack.c.l.s4 1983009808
        %v933 = vunpack.c.0.s8 %v932
        %v934 = vlaneseq
        %v935 = vshrl.u32 %v934, 7
        %v936 = vsub.s32 %v933, %v935
        %v937 = vrot.slane %v923, %v936
        %v938 = vcombine.low %v837, %v845
        %v939 = vcombine.high %v837, %v845
        %v941 = vunpack.c.l.s4 1983009808
        %v942 = vunpack.c.0.s8 %v941
        %v943 = vlaneseq
        %v944 = vshrl.u32 %v943, 7
        %v945 = vsub.s32 %v942, %v944
        %v946 = vrot.slane %v938, %v945
        %v948 = vunpack.c.l.s4 1983009808
        %v949 = vunpack.c.0.s8 %v948
        %v950 = vlaneseq
        %v951 = vshrl.u32 %v950, 7
        %v952 = vsub.s32 %v949, %v951
        %v953 = vrot.slane %v939, %v952
        %v954 = vcombine.low %v930, %v946
        %v955 = vcombine.high %v930, %v946
        %v957 = vunpack.c.l.s4 1934713408
        %v958 = vunpack.c.0.s8 %v957
        %v959 = vlaneseq
        %v960 = vshrl.u32 %v959, 7
        %v961 = vsub.s32 %v958, %v960
        %v962 = vrot.slane %v954, %v961
        %v964 = vunpack.c.l.s4 1934713408
        %v965 = vunpack.c.0.s8 %v964
        %v966 = vlaneseq
        %v967 = vshrl.u32 %v966, 7
        %v968 = vsub.s32 %v965, %v967
        %v969 = vrot.slane %v955, %v968
        %v970 = vcombine.low %v937, %v953
        %v971 = vcombine.high %v937, %v953
        %v973 = vunpack.c.l.s4 1934713408
        %v974 = vunpack.c.0.s8 %v973
        %v975 = vlaneseq
        %v976 = vshrl.u32 %v975, 7
        %v977 = vsub.s32 %v974, %v976
        %v978 = vrot.slane %v970, %v977
        %v980 = vunpack.c.l.s4 1934713408
        %v981 = vunpack.c.0.s8 %v980
        %v982 = vlaneseq
        %v983 = vshrl.u32 %v982, 7
        %v984 = vsub.s32 %v981, %v983
        %v985 = vrot.slane %v971, %v984
        %v986 = vcombine.high %v962, 0.0
        %v987 = vcombine.high %v969, 0.0
        %v988 = vcombine.high %v978, 0.0
        %v989 = vcombine.high %v985, 0.0
        %v990 = vcombine.low %v894, %v901
        %v992 = vunpack.c.l.s4 1983009808
        %v993 = vunpack.c.0.s8 %v992
        %v994 = vlaneseq
        %v995 = vshrl.u32 %v994, 7
        %v996 = vsub.s32 %v993, %v995
        %v997 = vrot.slane %v990, %v996
        %v998 = vcombine.low %v918, %v919
        %v1000 = vunpack.c.l.s4 1983009808
        %v1001 = vunpack.c.0.s8 %v1000
        %v1002 = vlaneseq
        %v1003 = vshrl.u32 %v1002, 7
        %v1004 = vsub.s32 %v1001, %v1003
        %v1005 = vrot.slane %v998, %v1004
        %v1006 = vcombine.low %v910, %v917
        %v1008 = vunpack.c.l.s4 1983009808
        %v1009 = vunpack.c.0.s8 %v1008
        %v1010 = vlaneseq
        %v1011 = vshrl.u32 %v1010, 7
        %v1012 = vsub.s32 %v1009, %v1011
        %v1013 = vrot.slane %v1006, %v1012
        %v1014 = vcombine.low %v920, %v921
        %v1016 = vunpack.c.l.s4 1983009808
        %v1017 = vunpack.c.0.s8 %v1016
        %v1018 = vlaneseq
        %v1019 = vshrl.u32 %v1018, 7
        %v1020 = vsub.s32 %v1017, %v1019
        %v1021 = vrot.slane %v1014, %v1020
        %v1022 = vcombine.low %v997, %v1005
        %v1023 = vcombine.high %v997, %v1005
        %v1025 = vunpack.c.l.s4 1934713408
        %v1026 = vunpack.c.0.s8 %v1025
        %v1027 = vlaneseq
        %v1028 = vshrl.u32 %v1027, 7
        %v1029 = vsub.s32 %v1026, %v1028
        %v1030 = vrot.slane %v1022, %v1029
        %v1032 = vunpack.c.l.s4 1934713408
        %v1033 = vunpack.c.0.s8 %v1032
        %v1034 = vlaneseq
        %v1035 = vshrl.u32 %v1034, 7
        %v1036 = vsub.s32 %v1033, %v1035
        %v1037 = vrot.slane %v1023, %v1036
        %v1038 = vcombine.low %v1013, %v1021
        %v1039 = vcombine.high %v1013, %v1021
        %v1041 = vunpack.c.l.s4 1934713408
        %v1042 = vunpack.c.0.s8 %v1041
        %v1043 = vlaneseq
        %v1044 = vshrl.u32 %v1043, 7
        %v1045 = vsub.s32 %v1042, %v1044
        %v1046 = vrot.slane %v1038, %v1045
        %v1048 = vunpack.c.l.s4 1934713408
        %v1049 = vunpack.c.0.s8 %v1048
        %v1050 = vlaneseq
        %v1051 = vshrl.u32 %v1050, 7
        %v1052 = vsub.s32 %v1049, %v1051
        %v1053 = vrot.slane %v1039, %v1052
        %v1054 = vcombine.low %v1030, %v1046
        %v1055 = vcombine.high %v1030, %v1046
        %v1056 = vcombine.low %v1037, %v1053
        %v1057 = vcombine.high %v1037, %v1053
        %v1058 = vcombine.low %v962, %v969
        %v1060 = vunpack.c.l.s4 1983009808
        %v1061 = vunpack.c.0.s8 %v1060
        %v1062 = vlaneseq
        %v1063 = vshrl.u32 %v1062, 7
        %v1064 = vsub.s32 %v1061, %v1063
        %v1065 = vrot.slane %v1058, %v1064
        %v1066 = vcombine.low %v986, %v987
        %v1068 = vunpack.c.l.s4 1983009808
        %v1069 = vunpack.c.0.s8 %v1068
        %v1070 = vlaneseq
        %v1071 = vshrl.u32 %v1070, 7
        %v1072 = vsub.s32 %v1069, %v1071
        %v1073 = vrot.slane %v1066, %v1072
        %v1074 = vcombine.low %v978, %v985
        %v1076 = vunpack.c.l.s4 1983009808
        %v1077 = vunpack.c.0.s8 %v1076
        %v1078 = vlaneseq
        %v1079 = vshrl.u32 %v1078, 7
        %v1080 = vsub.s32 %v1077, %v1079
        %v1081 = vrot.slane %v1074, %v1080
        %v1082 = vcombine.low %v988, %v989
        %v1084 = vunpack.c.l.s4 1983009808
        %v1085 = vunpack.c.0.s8 %v1084
        %v1086 = vlaneseq
        %v1087 = vshrl.u32 %v1086, 7
        %v1088 = vsub.s32 %v1085, %v1087
        %v1089 = vrot.slane %v1082, %v1088
        %v1090 = vcombine.low %v1065, %v1073
        %v1091 = vcombine.high %v1065, %v1073
        %v1093 = vunpack.c.l.s4 1934713408
        %v1094 = vunpack.c.0.s8 %v1093
        %v1095 = vlaneseq
        %v1096 = vshrl.u32 %v1095, 7
        %v1097 = vsub.s32 %v1094, %v1096
        %v1098 = vrot.slane %v1090, %v1097
        %v1100 = vunpack.c.l.s4 1934713408
        %v1101 = vunpack.c.0.s8 %v1100
        %v1102 = vlaneseq
        %v1103 = vshrl.u32 %v1102, 7
        %v1104 = vsub.s32 %v1101, %v1103
        %v1105 = vrot.slane %v1091, %v1104
        %v1106 = vcombine.low %v1081, %v1089
        %v1107 = vcombine.high %v1081, %v1089
        %v1109 = vunpack.c.l.s4 1934713408
        %v1110 = vunpack.c.0.s8 %v1109
        %v1111 = vlaneseq
        %v1112 = vshrl.u32 %v1111, 7
        %v1113 = vsub.s32 %v1110, %v1112
        %v1114 = vrot.slane %v1106, %v1113
        %v1116 = vunpack.c.l.s4 1934713408
        %v1117 = vunpack.c.0.s8 %v1116
        %v1118 = vlaneseq
        %v1119 = vshrl.u32 %v1118, 7
        %v1120 = vsub.s32 %v1117, %v1119
        %v1121 = vrot.slane %v1107, %v1120
        %v1122 = vcombine.low %v1098, %v1114
        %v1123 = vcombine.high %v1098, %v1114
        %v1124 = vcombine.low %v1105, %v1121
        %v1125 = vcombine.high %v1105, %v1121
        %1126 = vst.msk [vmem:[%s377] sm:$0xff] %vm821, %v1054
        %1127 = vst.msk [vmem:[%s377 + $0x8] sm:$0xff] %vm821, %v1122
        %1128 = vst.msk [vmem:[%s377 + $0x10] sm:$0xff] %vm821, %v1055
        %1129 = vst.msk [vmem:[%s377 + $0x18] sm:$0xff] %vm821, %v1123
        %1130 = vst.msk [vmem:[%s377 + $0x20] sm:$0xff] %vm821, %v1056
        %1131 = vst.msk [vmem:[%s377 + $0x28] sm:$0xff] %vm821, %v1124
        %1132 = vst.msk [vmem:[%s377 + $0x30] sm:$0xff] %vm821, %v1057
        %1133 = vst.msk [vmem:[%s377 + $0x38] sm:$0xff] %vm821, %v1125
        %1134 = vrot.lane.b32.xlu0 %v521, 64
        %v1135 = vpop.permute.xlu0 %1134
        %1136 = vrot.lane.b32.xlu0 %v526, 64
        %v1137 = vpop.permute.xlu0 %1136
        %1138 = vrot.lane.b32.xlu0 %v532, 64
        %v1139 = vpop.permute.xlu0 %1138
        %1140 = vrot.lane.b32.xlu0 %v534, 64
        %v1141 = vpop.permute.xlu0 %1140
        %1142 = vrot.lane.b32.xlu0 %v538, 64
        %v1143 = vpop.permute.xlu0 %1142
        %1144 = vrot.lane.b32.xlu0 %v540, 64
        %v1145 = vpop.permute.xlu0 %1144
        %1146 = vrot.lane.b32.xlu0 %v544, 64
        %v1147 = vpop.permute.xlu0 %1146
        %1148 = vrot.lane.b32.xlu0 %v546, 64
        %v1149 = vpop.permute.xlu0 %1148
        %v1158 = vcombine.low %v1135, %v1143
        %v1159 = vcombine.high %v1135, %v1143
        %v1161 = vunpack.c.l.s4 1983009808
        %v1162 = vunpack.c.0.s8 %v1161
        %v1163 = vlaneseq
        %v1164 = vshrl.u32 %v1163, 7
        %v1165 = vsub.s32 %v1162, %v1164
        %v1166 = vrot.slane %v1158, %v1165
        %v1168 = vunpack.c.l.s4 1983009808
        %v1169 = vunpack.c.0.s8 %v1168
        %v1170 = vlaneseq
        %v1171 = vshrl.u32 %v1170, 7
        %v1172 = vsub.s32 %v1169, %v1171
        %v1173 = vrot.slane %v1159, %v1172
        %v1174 = vcombine.low %v1139, %v1147
        %v1175 = vcombine.high %v1139, %v1147
        %v1177 = vunpack.c.l.s4 1983009808
        %v1178 = vunpack.c.0.s8 %v1177
        %v1179 = vlaneseq
        %v1180 = vshrl.u32 %v1179, 7
        %v1181 = vsub.s32 %v1178, %v1180
        %v1182 = vrot.slane %v1174, %v1181
        %v1184 = vunpack.c.l.s4 1983009808
        %v1185 = vunpack.c.0.s8 %v1184
        %v1186 = vlaneseq
        %v1187 = vshrl.u32 %v1186, 7
        %v1188 = vsub.s32 %v1185, %v1187
        %v1189 = vrot.slane %v1175, %v1188
        %v1190 = vcombine.low %v1166, %v1182
        %v1191 = vcombine.high %v1166, %v1182
        %v1193 = vunpack.c.l.s4 1934713408
        %v1194 = vunpack.c.0.s8 %v1193
        %v1195 = vlaneseq
        %v1196 = vshrl.u32 %v1195, 7
        %v1197 = vsub.s32 %v1194, %v1196
        %v1198 = vrot.slane %v1190, %v1197
        %v1200 = vunpack.c.l.s4 1934713408
        %v1201 = vunpack.c.0.s8 %v1200
        %v1202 = vlaneseq
        %v1203 = vshrl.u32 %v1202, 7
        %v1204 = vsub.s32 %v1201, %v1203
        %v1205 = vrot.slane %v1191, %v1204
        %v1206 = vcombine.low %v1173, %v1189
        %v1207 = vcombine.high %v1173, %v1189
        %v1209 = vunpack.c.l.s4 1934713408
        %v1210 = vunpack.c.0.s8 %v1209
        %v1211 = vlaneseq
        %v1212 = vshrl.u32 %v1211, 7
        %v1213 = vsub.s32 %v1210, %v1212
        %v1214 = vrot.slane %v1206, %v1213
        %v1216 = vunpack.c.l.s4 1934713408
        %v1217 = vunpack.c.0.s8 %v1216
        %v1218 = vlaneseq
        %v1219 = vshrl.u32 %v1218, 7
        %v1220 = vsub.s32 %v1217, %v1219
        %v1221 = vrot.slane %v1207, %v1220
        %v1222 = vcombine.high %v1198, 0.0
        %v1223 = vcombine.high %v1205, 0.0
        %v1224 = vcombine.high %v1214, 0.0
        %v1225 = vcombine.high %v1221, 0.0
        %v1226 = vcombine.low %v1137, %v1145
        %v1227 = vcombine.high %v1137, %v1145
        %v1229 = vunpack.c.l.s4 1983009808
        %v1230 = vunpack.c.0.s8 %v1229
        %v1231 = vlaneseq
        %v1232 = vshrl.u32 %v1231, 7
        %v1233 = vsub.s32 %v1230, %v1232
        %v1234 = vrot.slane %v1226, %v1233
        %v1236 = vunpack.c.l.s4 1983009808
        %v1237 = vunpack.c.0.s8 %v1236
        %v1238 = vlaneseq
        %v1239 = vshrl.u32 %v1238, 7
        %v1240 = vsub.s32 %v1237, %v1239
        %v1241 = vrot.slane %v1227, %v1240
        %v1242 = vcombine.low %v1141, %v1149
        %v1243 = vcombine.high %v1141, %v1149
        %v1245 = vunpack.c.l.s4 1983009808
        %v1246 = vunpack.c.0.s8 %v1245
        %v1247 = vlaneseq
        %v1248 = vshrl.u32 %v1247, 7
        %v1249 = vsub.s32 %v1246, %v1248
        %v1250 = vrot.slane %v1242, %v1249
        %v1252 = vunpack.c.l.s4 1983009808
        %v1253 = vunpack.c.0.s8 %v1252
        %v1254 = vlaneseq
        %v1255 = vshrl.u32 %v1254, 7
        %v1256 = vsub.s32 %v1253, %v1255
        %v1257 = vrot.slane %v1243, %v1256
        %v1258 = vcombine.low %v1234, %v1250
        %v1259 = vcombine.high %v1234, %v1250
        %v1261 = vunpack.c.l.s4 1934713408
        %v1262 = vunpack.c.0.s8 %v1261
        %v1263 = vlaneseq
        %v1264 = vshrl.u32 %v1263, 7
        %v1265 = vsub.s32 %v1262, %v1264
        %v1266 = vrot.slane %v1258, %v1265
        %v1268 = vunpack.c.l.s4 1934713408
        %v1269 = vunpack.c.0.s8 %v1268
        %v1270 = vlaneseq
        %v1271 = vshrl.u32 %v1270, 7
        %v1272 = vsub.s32 %v1269, %v1271
        %v1273 = vrot.slane %v1259, %v1272
        %v1274 = vcombine.low %v1241, %v1257
        %v1275 = vcombine.high %v1241, %v1257
        %v1277 = vunpack.c.l.s4 1934713408
        %v1278 = vunpack.c.0.s8 %v1277
        %v1279 = vlaneseq
        %v1280 = vshrl.u32 %v1279, 7
        %v1281 = vsub.s32 %v1278, %v1280
        %v1282 = vrot.slane %v1274, %v1281
        %v1284 = vunpack.c.l.s4 1934713408
        %v1285 = vunpack.c.0.s8 %v1284
        %v1286 = vlaneseq
        %v1287 = vshrl.u32 %v1286, 7
        %v1288 = vsub.s32 %v1285, %v1287
        %v1289 = vrot.slane %v1275, %v1288
        %v1290 = vcombine.high %v1266, 0.0
        %v1291 = vcombine.high %v1273, 0.0
        %v1292 = vcombine.high %v1282, 0.0
        %v1293 = vcombine.high %v1289, 0.0
        %v1294 = vcombine.low %v1198, %v1205
        %v1296 = vunpack.c.l.s4 1983009808
        %v1297 = vunpack.c.0.s8 %v1296
        %v1298 = vlaneseq
        %v1299 = vshrl.u32 %v1298, 7
        %v1300 = vsub.s32 %v1297, %v1299
        %v1301 = vrot.slane %v1294, %v1300
        %v1302 = vcombine.low %v1222, %v1223
        %v1304 = vunpack.c.l.s4 1983009808
        %v1305 = vunpack.c.0.s8 %v1304
        %v1306 = vlaneseq
        %v1307 = vshrl.u32 %v1306, 7
        %v1308 = vsub.s32 %v1305, %v1307
        %v1309 = vrot.slane %v1302, %v1308
        %v1310 = vcombine.low %v1214, %v1221
        %v1312 = vunpack.c.l.s4 1983009808
        %v1313 = vunpack.c.0.s8 %v1312
        %v1314 = vlaneseq
        %v1315 = vshrl.u32 %v1314, 7
        %v1316 = vsub.s32 %v1313, %v1315
        %v1317 = vrot.slane %v1310, %v1316
        %v1318 = vcombine.low %v1224, %v1225
        %v1320 = vunpack.c.l.s4 1983009808
        %v1321 = vunpack.c.0.s8 %v1320
        %v1322 = vlaneseq
        %v1323 = vshrl.u32 %v1322, 7
        %v1324 = vsub.s32 %v1321, %v1323
        %v1325 = vrot.slane %v1318, %v1324
        %v1326 = vcombine.low %v1301, %v1309
        %v1327 = vcombine.high %v1301, %v1309
        %v1329 = vunpack.c.l.s4 1934713408
        %v1330 = vunpack.c.0.s8 %v1329
        %v1331 = vlaneseq
        %v1332 = vshrl.u32 %v1331, 7
        %v1333 = vsub.s32 %v1330, %v1332
        %v1334 = vrot.slane %v1326, %v1333
        %v1336 = vunpack.c.l.s4 1934713408
        %v1337 = vunpack.c.0.s8 %v1336
        %v1338 = vlaneseq
        %v1339 = vshrl.u32 %v1338, 7
        %v1340 = vsub.s32 %v1337, %v1339
        %v1341 = vrot.slane %v1327, %v1340
        %v1342 = vcombine.low %v1317, %v1325
        %v1343 = vcombine.high %v1317, %v1325
        %v1345 = vunpack.c.l.s4 1934713408
        %v1346 = vunpack.c.0.s8 %v1345
        %v1347 = vlaneseq
        %v1348 = vshrl.u32 %v1347, 7
        %v1349 = vsub.s32 %v1346, %v1348
        %v1350 = vrot.slane %v1342, %v1349
        %v1352 = vunpack.c.l.s4 1934713408
        %v1353 = vunpack.c.0.s8 %v1352
        %v1354 = vlaneseq
        %v1355 = vshrl.u32 %v1354, 7
        %v1356 = vsub.s32 %v1353, %v1355
        %v1357 = vrot.slane %v1343, %v1356
        %v1358 = vcombine.low %v1334, %v1350
        %v1359 = vcombine.high %v1334, %v1350
        %v1360 = vcombine.low %v1341, %v1357
        %v1361 = vcombine.high %v1341, %v1357
        %v1362 = vcombine.low %v1266, %v1273
        %v1364 = vunpack.c.l.s4 1983009808
        %v1365 = vunpack.c.0.s8 %v1364
        %v1366 = vlaneseq
        %v1367 = vshrl.u32 %v1366, 7
        %v1368 = vsub.s32 %v1365, %v1367
        %v1369 = vrot.slane %v1362, %v1368
        %v1370 = vcombine.low %v1290, %v1291
        %v1372 = vunpack.c.l.s4 1983009808
        %v1373 = vunpack.c.0.s8 %v1372
        %v1374 = vlaneseq
        %v1375 = vshrl.u32 %v1374, 7
        %v1376 = vsub.s32 %v1373, %v1375
        %v1377 = vrot.slane %v1370, %v1376
        %v1378 = vcombine.low %v1282, %v1289
        %v1380 = vunpack.c.l.s4 1983009808
        %v1381 = vunpack.c.0.s8 %v1380
        %v1382 = vlaneseq
        %v1383 = vshrl.u32 %v1382, 7
        %v1384 = vsub.s32 %v1381, %v1383
        %v1385 = vrot.slane %v1378, %v1384
        %v1386 = vcombine.low %v1292, %v1293
        %v1388 = vunpack.c.l.s4 1983009808
        %v1389 = vunpack.c.0.s8 %v1388
        %v1390 = vlaneseq
        %v1391 = vshrl.u32 %v1390, 7
        %v1392 = vsub.s32 %v1389, %v1391
        %v1393 = vrot.slane %v1386, %v1392
        %v1394 = vcombine.low %v1369, %v1377
        %v1395 = vcombine.high %v1369, %v1377
        %v1397 = vunpack.c.l.s4 1934713408
        %v1398 = vunpack.c.0.s8 %v1397
        %v1399 = vlaneseq
        %v1400 = vshrl.u32 %v1399, 7
        %v1401 = vsub.s32 %v1398, %v1400
        %v1402 = vrot.slane %v1394, %v1401
        %v1404 = vunpack.c.l.s4 1934713408
        %v1405 = vunpack.c.0.s8 %v1404
        %v1406 = vlaneseq
        %v1407 = vshrl.u32 %v1406, 7
        %v1408 = vsub.s32 %v1405, %v1407
        %v1409 = vrot.slane %v1395, %v1408
        %v1410 = vcombine.low %v1385, %v1393
        %v1411 = vcombine.high %v1385, %v1393
        %v1413 = vunpack.c.l.s4 1934713408
        %v1414 = vunpack.c.0.s8 %v1413
        %v1415 = vlaneseq
        %v1416 = vshrl.u32 %v1415, 7
        %v1417 = vsub.s32 %v1414, %v1416
        %v1418 = vrot.slane %v1410, %v1417
        %v1420 = vunpack.c.l.s4 1934713408
        %v1421 = vunpack.c.0.s8 %v1420
        %v1422 = vlaneseq
        %v1423 = vshrl.u32 %v1422, 7
        %v1424 = vsub.s32 %v1421, %v1423
        %v1425 = vrot.slane %v1411, %v1424
        %v1426 = vcombine.low %v1402, %v1418
        %v1427 = vcombine.high %v1402, %v1418
        %v1428 = vcombine.low %v1409, %v1425
        %v1429 = vcombine.high %v1409, %v1425
        %1430 = vst.msk [vmem:[%s387] sm:$0xff] %vm821, %v1358
        %1431 = vst.msk [vmem:[%s387 + $0x8] sm:$0xff] %vm821, %v1426
        %1432 = vst.msk [vmem:[%s387 + $0x10] sm:$0xff] %vm821, %v1359
        %1433 = vst.msk [vmem:[%s387 + $0x18] sm:$0xff] %vm821, %v1427
        %1434 = vst.msk [vmem:[%s387 + $0x20] sm:$0xff] %vm821, %v1360
        %1435 = vst.msk [vmem:[%s387 + $0x28] sm:$0xff] %vm821, %v1428
        %1436 = vst.msk [vmem:[%s387 + $0x30] sm:$0xff] %vm821, %v1361
        %1437 = vst.msk [vmem:[%s387 + $0x38] sm:$0xff] %vm821, %v1429
        %s1438 = smul.u32 2, %s28
        %p1439 = scmp.lt.s32.totalorder %s27, 1
        %s1440 = scalar_select %p1439, %s27, 1
        %p1441 = scmp.lt.s32.totalorder %s1438, 1
        %s1442 = scalar_select %p1441, %s1438, 1
        %s1443 = smul.addr %s1440, 8
        %s1444 = sadd.s32 %s1442, %s1443
        %s1445 = smul.addr %s1444, 8
        %s1446 = scalar_lea.vmem %s5, %s1445
        %s1447 = smul.u32 2, %s28
        %p1448 = scmp.lt.s32.totalorder %s27, 1
        %s1449 = scalar_select %p1448, %s27, 1
        %p1450 = scmp.lt.s32.totalorder %s1447, 1
        %s1451 = scalar_select %p1450, %s1447, 1
        %s1452 = smul.addr %s1449, 8
        %s1453 = sadd.s32 %s1451, %s1452
        %s1454 = smul.addr %s1453, 8
        %s1455 = scalar_lea.vmem %s6, %s1454
        %s1456 = smul.u32 2, %s28
        %p1457 = scmp.lt.s32.totalorder %s27, 1
        %s1458 = scalar_select %p1457, %s27, 1
        %p1459 = scmp.lt.s32.totalorder %s1456, 1
        %s1460 = scalar_select %p1459, %s1456, 1
        %s1461 = smul.addr %s1458, 8
        %s1462 = sadd.s32 %s1460, %s1461
        %s1463 = smul.addr %s1462, 8
        %s1464 = scalar_lea.vmem %s7, %s1463
        // Predicated region
        $region49: #{tpu_custom_call.1} parent=39 // pred_check
          %p1465 = pneg %p167
        $region50: #{tpu_custom_call.1} parent=39 // pred_check_branch
          %1467 = sbr.rel (%p1465) target = $region52
        $region51: #{tpu_custom_call.1} parent=39 // pred_region
          %s1468 = smul.u32 2, %s28
        $region52: #{tpu_custom_call.1} parent=39 // pred_fallthru
          _
        // Predicated region
        $region53: #{tpu_custom_call.1} parent=39 // pred_check
          %p1469 = pneg %p195
        $region54: #{tpu_custom_call.1} parent=39 // pred_check_branch
          %1471 = sbr.rel (%p1469) target = $region56
        $region55: #{tpu_custom_call.1} parent=39 // pred_region
          %s1472 = smul.u32 2, %s28
        $region56: #{tpu_custom_call.1} parent=39 // pred_fallthru
          _
        // Predicated region
        $region57: #{tpu_custom_call.1} parent=39 // pred_check
          %p1473 = pneg %p223
        $region58: #{tpu_custom_call.1} parent=39 // pred_check_branch
          %1475 = sbr.rel (%p1473) target = $region60
        $region59: #{tpu_custom_call.1} parent=39 // pred_region
          %s1476 = smul.u32 2, %s28
        $region60: #{tpu_custom_call.1} parent=39 // pred_fallthru
          _
      $region40: #{tpu_custom_call.1} parent=5 // pred_fallthru
        _
      %p1477 = scmp.le.s32.totalorder 2, %s18
      // Predicated region
      $region61: #{tpu_custom_call.1} parent=5 // pred_check
        %p1478 = pneg %p1477
      $region62: #{tpu_custom_call.1} parent=5 // pred_check_branch
        %1480 = sbr.rel (%p1478) target = $region64
      $region63: #{tpu_custom_call.1} parent=5 // pred_region
        %s1481 = ssub.s32 %s18, 2
        // Predicated region
        $region65: #{tpu_custom_call.1} parent=63 // pred_check
          %p1482 = pneg %p173
        $region66: #{tpu_custom_call.1} parent=63 // pred_check_branch
          %1484 = sbr.rel (%p1482) target = $region68
        $region67: #{tpu_custom_call.1} parent=63 // pred_region
          %s1485 = smul.u32 2, %s30
          %p1486 = scmp.lt.s32.totalorder %s29, 1
          %s1487 = scalar_select %p1486, %s29, 1
          %p1488 = scmp.lt.s32.totalorder %s1485, 1
          %s1489 = scalar_select %p1488, %s1485, 1
          %s1490 = smul.addr %s1487, 8
          %s1491 = sadd.s32 %s1489, %s1490
          %s1492 = smul.addr %s1491, 8
          %s1493 = scalar_lea.vmem %s5, %s1492
        $region68: #{tpu_custom_call.1} parent=63 // pred_fallthru
          _
        // Predicated region
        $region69: #{tpu_custom_call.1} parent=63 // pred_check
          %p1494 = pneg %p201
        $region70: #{tpu_custom_call.1} parent=63 // pred_check_branch
          %1496 = sbr.rel (%p1494) target = $region72
        $region71: #{tpu_custom_call.1} parent=63 // pred_region
          %s1497 = smul.u32 2, %s30
          %p1498 = scmp.lt.s32.totalorder %s29, 1
          %s1499 = scalar_select %p1498, %s29, 1
          %p1500 = scmp.lt.s32.totalorder %s1497, 1
          %s1501 = scalar_select %p1500, %s1497, 1
          %s1502 = smul.addr %s1499, 8
          %s1503 = sadd.s32 %s1501, %s1502
          %s1504 = smul.addr %s1503, 8
          %s1505 = scalar_lea.vmem %s6, %s1504
        $region72: #{tpu_custom_call.1} parent=63 // pred_fallthru
          _
        // Predicated region
        $region73: #{tpu_custom_call.1} parent=63 // pred_check
          %p1506 = pneg %p229
        $region74: #{tpu_custom_call.1} parent=63 // pred_check_branch
          %1508 = sbr.rel (%p1506) target = $region76
        $region75: #{tpu_custom_call.1} parent=63 // pred_region
          %s1509 = smul.u32 2, %s30
          %p1510 = scmp.lt.s32.totalorder %s29, 1
          %s1511 = scalar_select %p1510, %s29, 1
          %p1512 = scmp.lt.s32.totalorder %s1509, 1
          %s1513 = scalar_select %p1512, %s1509, 1
          %s1514 = smul.addr %s1511, 8
          %s1515 = sadd.s32 %s1513, %s1514
          %s1516 = smul.addr %s1515, 8
          %s1517 = scalar_lea.vmem %s7, %s1516
        $region76: #{tpu_custom_call.1} parent=63 // pred_fallthru
          _
      $region64: #{tpu_custom_call.1} parent=5 // pred_fallthru
        _
    $region6: #{tpu_custom_call.1} parent=1 // loop_footer
      %s22 = sadd.s32 1, %s18
    $region7: #{tpu_custom_call.1} parent=1 // loop_footer_branch
      %17 = sbr.rel target = $region3
    $region8: #{tpu_custom_call.1} parent=1 // loop_exit
      _
    %1518 = vsyncpa [#allocation3], 1
    %s1519 = scalar_lea.sflag [#allocation3], 1
    %1520 = vsyncpa %s1519, 1
    %1521 = vsyncpa [#allocation5], 1

</llo_original>
